<compile_context>
chip_gen: v7x
topology: tpu7x:2x2x1
jax: 0.10.0
libtpu: 0.0.40
codegen_flags: <defaults>
</compile_context>

<pallas_src>
import functools

import jax
import jax.numpy as jnp
from jax.experimental import pallas as pl
from jax.experimental.pallas import tpu as pltpu


# ------------------------- fused attention kernel ---------------------------
def _fused_attn_kernel(x_ref, e_ref, wa_ref, ba_ref, wp_ref, bp_ref, o_ref,
                       a_ref, *, n_head):
    """Single invocation: c_attn -> per-head attention -> merge -> c_proj."""
    E = wp_ref.shape[0]
    hd = E // n_head
    BT = e_ref.shape[0]
    N = e_ref.shape[-1]

    # c_attn: one (BT*N, E) x (E, 3E) MXU matmul, bf16 operands, f32 accumulate.
    x = x_ref[...].astype(jnp.bfloat16)                    # (BT*N, E)
    qkv = (jnp.dot(x, wa_ref[...], preferred_element_type=jnp.float32)
           + ba_ref[...])                                  # (BT*N, 3E) f32
    qkv = qkv.reshape(BT, N, 3 * E)                        # leading split (tile-aligned)

    e = e_ref[...]                                         # (BT, N, N) f32, shared by heads

    for h in range(n_head):                                # static unroll over heads
        # 1/sqrt(d_head) was folded into the Q columns of w_attn / b_attn on host.
        q = qkv[:, :, h * hd:(h + 1) * hd].astype(jnp.bfloat16)
        k = qkv[:, :, E + h * hd:E + (h + 1) * hd].astype(jnp.bfloat16)
        v = qkv[:, :, 2 * E + h * hd:2 * E + (h + 1) * hd].astype(jnp.bfloat16)

        # bt-batched QK^T (no explicit k transpose), f32 scores.
        s = jnp.einsum('bqd,bkd->bqk', q, k,
                       preferred_element_type=jnp.float32) + e   # (BT, N, N)
        s = s - jnp.max(s, axis=-1, keepdims=True)
        p = jnp.exp(s)
        # Softmax denominator on the EUP (approx reciprocal, otherwise-idle slot).
        p = p * pl.reciprocal(jnp.sum(p, axis=-1, keepdims=True), approx=True)

        # PV, written straight into the head's lane slice of the merge slab.
        a_ref[:, :, h * hd:(h + 1) * hd] = jnp.einsum(
            'bqk,bkd->bqd', p.astype(jnp.bfloat16), v,
            preferred_element_type=jnp.float32)            # (BT, N, hd) f32

    # merge_heads is just reading the lane-dense slab; c_proj is one big matmul.
    a = a_ref[...].reshape(BT * N, E).astype(jnp.bfloat16)
    out = (jnp.dot(a, wp_ref[...], preferred_element_type=jnp.float32)
           + bp_ref[...])                                  # (BT*N, E) f32
    o_ref[...] = out.astype(o_ref.dtype)


# ------------------------------ forward pass ---------------------------------
def node_attention_forward(params, hidden_states, edge_matrix, n_head):
    B, T, N, E = hidden_states.shape
    BT = B * T
    hd = E // n_head
    scale = 1.0 / float(hd) ** 0.5

    x2d = hidden_states.reshape(BT * N, E)                 # rows = BT*N (batched matmul M)
    edge = edge_matrix.reshape(BT, N, N)                   # squeeze the head-broadcast dim

    # Fold 1/sqrt(d_head) into the static Q columns of c_attn (one-time weight prep).
    q_scale = jnp.concatenate([jnp.full((E,), scale, jnp.float32),
                               jnp.ones((2 * E,), jnp.float32)])
    wa = (params["w_attn"] * q_scale[None, :]).astype(jnp.bfloat16)   # (E, 3E) bf16
    ba = (params["b_attn"] * q_scale).reshape(1, 3 * E).astype(jnp.float32)
    wp = params["w_proj"].astype(jnp.bfloat16)                        # (E, E) bf16
    bp = params["b_proj"].reshape(1, E).astype(jnp.float32)

    # Advisory cost estimate for XLA's scheduler around the custom call.
    flops = int(2 * (BT * N) * E * 3 * E                  # c_attn
                + n_head * (2 * BT * N * N * hd) * 2      # QK^T + PV
                + 2 * (BT * N) * E * E)                   # c_proj
    transcendentals = int(BT * n_head * N * N)            # exp
    bytes_accessed = int(4 * (x2d.size + edge.size + ba.size + bp.size
                              + BT * N * E)
                         + 2 * (wa.size + wp.size))

    kernel = functools.partial(_fused_attn_kernel, n_head=n_head)

    out = pl.pallas_call(
        kernel,
        out_shape=jax.ShapeDtypeStruct((BT * N, E), hidden_states.dtype),
        in_specs=[pl.BlockSpec(memory_space=pltpu.MemorySpace.VMEM)] * 6,
        out_specs=pl.BlockSpec(memory_space=pltpu.MemorySpace.VMEM),
        scratch_shapes=[pltpu.VMEM((BT, N, E), jnp.float32)],   # head-merge slab
        cost_estimate=pl.CostEstimate(
            flops=flops,
            transcendentals=transcendentals,
            bytes_accessed=bytes_accessed),
    )(x2d, edge, wa, ba, wp, bp)

    return out.reshape(B, T, N, E)


# --------------------------- plain-JAX reference ------------------------------
def ref_forward(params, hidden_states, edge_matrix, n_head):
    B, T, N, E = hidden_states.shape
    hd = E // n_head
    x = hidden_states.reshape(B * T, N, E)
    qkv = x @ params["w_attn"] + params["b_attn"]
    q, k, v = jnp.split(qkv, 3, axis=-1)
    q = q.reshape(B * T, N, n_head, hd).transpose(0, 2, 1, 3)
    k = k.reshape(B * T, N, n_head, hd).transpose(0, 2, 3, 1)
    v = v.reshape(B * T, N, n_head, hd).transpose(0, 2, 1, 3)
    w = (q @ k) / jnp.sqrt(jnp.float32(hd)) + edge_matrix
    w = jax.nn.softmax(w, axis=-1)
    a = (w @ v).transpose(0, 2, 1, 3).reshape(B * T, N, E)
    a = a @ params["w_proj"] + params["b_proj"]
    return a.reshape(B, T, N, E)


if __name__ == "__main__":
    B, T, N, E, n_head = 2, 2, 8, 32, 4  # config.n_embd=32, n_head=4, n_ctx>=N

    key = jax.random.PRNGKey(0)
    k1, k2, k3, k4 = jax.random.split(key, 4)

    # Deterministic parameter init (Conv1D: normal std=0.02 weights, zero bias)
    params = {
        "w_attn": 0.02 * jax.random.normal(k1, (E, 3 * E), jnp.float32),
        "b_attn": jnp.zeros((3 * E,), jnp.float32),
        "w_proj": 0.02 * jax.random.normal(k2, (E, E), jnp.float32),
        "b_proj": jnp.zeros((E,), jnp.float32),
    }

    hidden_states = jax.random.normal(k3, (B, T, N, E), jnp.float32)
    # edge_matrix broadcasts against attention weights of shape (B*T, n_head, N, N)
    edge_matrix = jax.random.normal(k4, (B * T, 1, N, N), jnp.float32)

    out = node_attention_forward(params, hidden_states, edge_matrix, n_head)
    out = jax.block_until_ready(out)

    ref = ref_forward(params, hidden_states, edge_matrix, n_head)
    assert out.shape == (B, T, N, E)
    # Tolerance covers bf16 MXU operands (f32 accumulation) and the EUP
    # approximate reciprocal in the softmax denominator.
    assert jnp.allclose(out, ref, atol=2e-3, rtol=2e-2), "mismatch vs reference"

    print("KERNEL_OK")
</pallas_src>

<mosaic_0001>
module attributes {stable_mosaic.version = 11 : i64} {
  func.func @_fused_attn_kernel(%arg0: memref<32x32xf32, #tpu.memory_space<vmem>>, %arg1: memref<4x8x8xf32, #tpu.memory_space<vmem>>, %arg2: memref<32x96xbf16, #tpu.memory_space<vmem>>, %arg3: memref<1x96xf32, #tpu.memory_space<vmem>>, %arg4: memref<32x32xbf16, #tpu.memory_space<vmem>>, %arg5: memref<1x32xf32, #tpu.memory_space<vmem>>, %arg6: memref<32x32xf32, #tpu.memory_space<vmem>>, %arg7: memref<4x8x32xf32, #tpu.memory_space<vmem>>) attributes {dimension_semantics = [], scalar_prefetch = 0 : i64, scratch_operands = 1 : i64, tpu.core_type = #tpu.core_type<tc>} {
    %c0 = arith.constant 0 : index
    %c0_0 = arith.constant 0 : index
    %0 = vector.load %arg0[%c0, %c0_0] : memref<32x32xf32, #tpu.memory_space<vmem>>, vector<32x32xf32>
    %1 = arith.truncf %0 : vector<32x32xf32> to vector<32x32xbf16>
    %c0_1 = arith.constant 0 : index
    %c0_2 = arith.constant 0 : index
    %2 = vector.load %arg2[%c0_1, %c0_2] : memref<32x96xbf16, #tpu.memory_space<vmem>>, vector<32x96xbf16>
    %cst = arith.constant dense<0.000000e+00> : vector<32x96xf32>
    %3 = tpu.matmul %1, %2, %cst {dimension_numbers = #tpu.dot_dimension_numbers<[1], [0], [0], [1], [0, 0, 1, 1], [], []>} : vector<32x32xbf16>, vector<32x96xbf16>, vector<32x96xf32> -> vector<32x96xf32>
    %c0_3 = arith.constant 0 : index
    %c0_4 = arith.constant 0 : index
    %4 = vector.load %arg3[%c0_3, %c0_4] : memref<1x96xf32, #tpu.memory_space<vmem>>, vector<1x96xf32>
    %5 = vector.broadcast %4 : vector<1x96xf32> to vector<32x96xf32>
    %6 = arith.addf %3, %5 : vector<32x96xf32>
    %7 = vector.shape_cast %6 : vector<32x96xf32> to vector<4x8x96xf32>
    %c0_5 = arith.constant 0 : index
    %c0_6 = arith.constant 0 : index
    %c0_7 = arith.constant 0 : index
    %8 = vector.load %arg1[%c0_5, %c0_6, %c0_7] : memref<4x8x8xf32, #tpu.memory_space<vmem>>, vector<4x8x8xf32>
    %9 = vector.extract_strided_slice %7 {offsets = [0, 0, 0], sizes = [4, 8, 8], strides = [1, 1, 1]} : vector<4x8x96xf32> to vector<4x8x8xf32>
    %10 = arith.truncf %9 : vector<4x8x8xf32> to vector<4x8x8xbf16>
    %11 = vector.extract_strided_slice %7 {offsets = [0, 0, 32], sizes = [4, 8, 8], strides = [1, 1, 1]} : vector<4x8x96xf32> to vector<4x8x8xf32>
    %12 = arith.truncf %11 : vector<4x8x8xf32> to vector<4x8x8xbf16>
    %13 = vector.extract_strided_slice %7 {offsets = [0, 0, 64], sizes = [4, 8, 8], strides = [1, 1, 1]} : vector<4x8x96xf32> to vector<4x8x8xf32>
    %14 = arith.truncf %13 : vector<4x8x8xf32> to vector<4x8x8xbf16>
    "tpu.trace_start"() <{level = 10 : i32, message = "bqd,bkd->bqk"}> : () -> ()
    %cst_8 = arith.constant dense<0.000000e+00> : vector<4x8x8xf32>
    %15 = tpu.matmul %10, %12, %cst_8 {dimension_numbers = #tpu.dot_dimension_numbers<[2], [2], [1], [1], [0, 0, 0, 1, 1, 1], [0], [0]>} : vector<4x8x8xbf16>, vector<4x8x8xbf16>, vector<4x8x8xf32> -> vector<4x8x8xf32>
    "tpu.trace_stop"() : () -> ()
    %16 = arith.addf %15, %8 : vector<4x8x8xf32>
    %cst_9 = arith.constant dense<0xFF800000> : vector<4x8xf32>
    %17 = vector.multi_reduction <maximumf>, %16, %cst_9 [2] : vector<4x8x8xf32> to vector<4x8xf32>
    %18 = vector.shape_cast %17 : vector<4x8xf32> to vector<4x8x1xf32>
    %19 = vector.broadcast %18 : vector<4x8x1xf32> to vector<4x8x8xf32>
    %20 = arith.subf %16, %19 : vector<4x8x8xf32>
    %21 = math.exp %20 : vector<4x8x8xf32>
    %cst_10 = arith.constant dense<0.000000e+00> : vector<4x8xf32>
    %22 = vector.multi_reduction <add>, %21, %cst_10 [2] : vector<4x8x8xf32> to vector<4x8xf32>
    %23 = vector.shape_cast %22 : vector<4x8xf32> to vector<4x8x1xf32>
    %24 = tpu.reciprocal %23 {approx = true} : vector<4x8x1xf32> -> vector<4x8x1xf32>
    %25 = vector.broadcast %24 : vector<4x8x1xf32> to vector<4x8x8xf32>
    %26 = arith.mulf %21, %25 : vector<4x8x8xf32>
    %27 = arith.truncf %26 : vector<4x8x8xf32> to vector<4x8x8xbf16>
    "tpu.trace_start"() <{level = 10 : i32, message = "bqk,bkd->bqd"}> : () -> ()
    %cst_11 = arith.constant dense<0.000000e+00> : vector<4x8x8xf32>
    %28 = tpu.matmul %27, %14, %cst_11 {dimension_numbers = #tpu.dot_dimension_numbers<[2], [1], [1], [2], [0, 0, 0, 1, 1, 2], [0], [0]>} : vector<4x8x8xbf16>, vector<4x8x8xbf16>, vector<4x8x8xf32> -> vector<4x8x8xf32>
    "tpu.trace_stop"() : () -> ()
    %c0_12 = arith.constant 0 : index
    %c0_13 = arith.constant 0 : index
    %c0_14 = arith.constant 0 : index
    %29 = vector.load %arg7[%c0_12, %c0_13, %c0_14] : memref<4x8x32xf32, #tpu.memory_space<vmem>>, vector<4x8x8xf32>
    tpu.vector_store %arg7[%c0_12, %c0_13, %c0_14], %28 {strides = array<i32>} : memref<4x8x32xf32, #tpu.memory_space<vmem>>, vector<4x8x8xf32>,
    %30 = vector.extract_strided_slice %7 {offsets = [0, 0, 8], sizes = [4, 8, 8], strides = [1, 1, 1]} : vector<4x8x96xf32> to vector<4x8x8xf32>
    %31 = arith.truncf %30 : vector<4x8x8xf32> to vector<4x8x8xbf16>
    %32 = vector.extract_strided_slice %7 {offsets = [0, 0, 40], sizes = [4, 8, 8], strides = [1, 1, 1]} : vector<4x8x96xf32> to vector<4x8x8xf32>
    %33 = arith.truncf %32 : vector<4x8x8xf32> to vector<4x8x8xbf16>
    %34 = vector.extract_strided_slice %7 {offsets = [0, 0, 72], sizes = [4, 8, 8], strides = [1, 1, 1]} : vector<4x8x96xf32> to vector<4x8x8xf32>
    %35 = arith.truncf %34 : vector<4x8x8xf32> to vector<4x8x8xbf16>
    "tpu.trace_start"() <{level = 10 : i32, message = "bqd,bkd->bqk"}> : () -> ()
    %cst_15 = arith.constant dense<0.000000e+00> : vector<4x8x8xf32>
    %36 = tpu.matmul %31, %33, %cst_15 {dimension_numbers = #tpu.dot_dimension_numbers<[2], [2], [1], [1], [0, 0, 0, 1, 1, 1], [0], [0]>} : vector<4x8x8xbf16>, vector<4x8x8xbf16>, vector<4x8x8xf32> -> vector<4x8x8xf32>
    "tpu.trace_stop"() : () -> ()
    %37 = arith.addf %36, %8 : vector<4x8x8xf32>
    %cst_16 = arith.constant dense<0xFF800000> : vector<4x8xf32>
    %38 = vector.multi_reduction <maximumf>, %37, %cst_16 [2] : vector<4x8x8xf32> to vector<4x8xf32>
    %39 = vector.shape_cast %38 : vector<4x8xf32> to vector<4x8x1xf32>
    %40 = vector.broadcast %39 : vector<4x8x1xf32> to vector<4x8x8xf32>
    %41 = arith.subf %37, %40 : vector<4x8x8xf32>
    %42 = math.exp %41 : vector<4x8x8xf32>
    %cst_17 = arith.constant dense<0.000000e+00> : vector<4x8xf32>
    %43 = vector.multi_reduction <add>, %42, %cst_17 [2] : vector<4x8x8xf32> to vector<4x8xf32>
    %44 = vector.shape_cast %43 : vector<4x8xf32> to vector<4x8x1xf32>
    %45 = tpu.reciprocal %44 {approx = true} : vector<4x8x1xf32> -> vector<4x8x1xf32>
    %46 = vector.broadcast %45 : vector<4x8x1xf32> to vector<4x8x8xf32>
    %47 = arith.mulf %42, %46 : vector<4x8x8xf32>
    %48 = arith.truncf %47 : vector<4x8x8xf32> to vector<4x8x8xbf16>
    "tpu.trace_start"() <{level = 10 : i32, message = "bqk,bkd->bqd"}> : () -> ()
    %cst_18 = arith.constant dense<0.000000e+00> : vector<4x8x8xf32>
    %49 = tpu.matmul %48, %35, %cst_18 {dimension_numbers = #tpu.dot_dimension_numbers<[2], [1], [1], [2], [0, 0, 0, 1, 1, 2], [0], [0]>} : vector<4x8x8xbf16>, vector<4x8x8xbf16>, vector<4x8x8xf32> -> vector<4x8x8xf32>
    "tpu.trace_stop"() : () -> ()
    %c0_19 = arith.constant 0 : index
    %c0_20 = arith.constant 0 : index
    %c8 = arith.constant 8 : index
    %50 = vector.load %arg7[%c0_19, %c0_20, %c8] : memref<4x8x32xf32, #tpu.memory_space<vmem>>, vector<4x8x8xf32>
    tpu.vector_store %arg7[%c0_19, %c0_20, %c8], %49 {strides = array<i32>} : memref<4x8x32xf32, #tpu.memory_space<vmem>>, vector<4x8x8xf32>,
    %51 = vector.extract_strided_slice %7 {offsets = [0, 0, 16], sizes = [4, 8, 8], strides = [1, 1, 1]} : vector<4x8x96xf32> to vector<4x8x8xf32>
    %52 = arith.truncf %51 : vector<4x8x8xf32> to vector<4x8x8xbf16>
    %53 = vector.extract_strided_slice %7 {offsets = [0, 0, 48], sizes = [4, 8, 8], strides = [1, 1, 1]} : vector<4x8x96xf32> to vector<4x8x8xf32>
    %54 = arith.truncf %53 : vector<4x8x8xf32> to vector<4x8x8xbf16>
    %55 = vector.extract_strided_slice %7 {offsets = [0, 0, 80], sizes = [4, 8, 8], strides = [1, 1, 1]} : vector<4x8x96xf32> to vector<4x8x8xf32>
    %56 = arith.truncf %55 : vector<4x8x8xf32> to vector<4x8x8xbf16>
    "tpu.trace_start"() <{level = 10 : i32, message = "bqd,bkd->bqk"}> : () -> ()
    %cst_21 = arith.constant dense<0.000000e+00> : vector<4x8x8xf32>
    %57 = tpu.matmul %52, %54, %cst_21 {dimension_numbers = #tpu.dot_dimension_numbers<[2], [2], [1], [1], [0, 0, 0, 1, 1, 1], [0], [0]>} : vector<4x8x8xbf16>, vector<4x8x8xbf16>, vector<4x8x8xf32> -> vector<4x8x8xf32>
    "tpu.trace_stop"() : () -> ()
    %58 = arith.addf %57, %8 : vector<4x8x8xf32>
    %cst_22 = arith.constant dense<0xFF800000> : vector<4x8xf32>
    %59 = vector.multi_reduction <maximumf>, %58, %cst_22 [2] : vector<4x8x8xf32> to vector<4x8xf32>
    %60 = vector.shape_cast %59 : vector<4x8xf32> to vector<4x8x1xf32>
    %61 = vector.broadcast %60 : vector<4x8x1xf32> to vector<4x8x8xf32>
    %62 = arith.subf %58, %61 : vector<4x8x8xf32>
    %63 = math.exp %62 : vector<4x8x8xf32>
    %cst_23 = arith.constant dense<0.000000e+00> : vector<4x8xf32>
    %64 = vector.multi_reduction <add>, %63, %cst_23 [2] : vector<4x8x8xf32> to vector<4x8xf32>
    %65 = vector.shape_cast %64 : vector<4x8xf32> to vector<4x8x1xf32>
    %66 = tpu.reciprocal %65 {approx = true} : vector<4x8x1xf32> -> vector<4x8x1xf32>
    %67 = vector.broadcast %66 : vector<4x8x1xf32> to vector<4x8x8xf32>
    %68 = arith.mulf %63, %67 : vector<4x8x8xf32>
    %69 = arith.truncf %68 : vector<4x8x8xf32> to vector<4x8x8xbf16>
    "tpu.trace_start"() <{level = 10 : i32, message = "bqk,bkd->bqd"}> : () -> ()
    %cst_24 = arith.constant dense<0.000000e+00> : vector<4x8x8xf32>
    %70 = tpu.matmul %69, %56, %cst_24 {dimension_numbers = #tpu.dot_dimension_numbers<[2], [1], [1], [2], [0, 0, 0, 1, 1, 2], [0], [0]>} : vector<4x8x8xbf16>, vector<4x8x8xbf16>, vector<4x8x8xf32> -> vector<4x8x8xf32>
    "tpu.trace_stop"() : () -> ()
    %c0_25 = arith.constant 0 : index
    %c0_26 = arith.constant 0 : index
    %c16 = arith.constant 16 : index
    %71 = vector.load %arg7[%c0_25, %c0_26, %c16] : memref<4x8x32xf32, #tpu.memory_space<vmem>>, vector<4x8x8xf32>
    tpu.vector_store %arg7[%c0_25, %c0_26, %c16], %70 {strides = array<i32>} : memref<4x8x32xf32, #tpu.memory_space<vmem>>, vector<4x8x8xf32>,
    %72 = vector.extract_strided_slice %7 {offsets = [0, 0, 24], sizes = [4, 8, 8], strides = [1, 1, 1]} : vector<4x8x96xf32> to vector<4x8x8xf32>
    %73 = arith.truncf %72 : vector<4x8x8xf32> to vector<4x8x8xbf16>
    %74 = vector.extract_strided_slice %7 {offsets = [0, 0, 56], sizes = [4, 8, 8], strides = [1, 1, 1]} : vector<4x8x96xf32> to vector<4x8x8xf32>
    %75 = arith.truncf %74 : vector<4x8x8xf32> to vector<4x8x8xbf16>
    %76 = vector.extract_strided_slice %7 {offsets = [0, 0, 88], sizes = [4, 8, 8], strides = [1, 1, 1]} : vector<4x8x96xf32> to vector<4x8x8xf32>
    %77 = arith.truncf %76 : vector<4x8x8xf32> to vector<4x8x8xbf16>
    "tpu.trace_start"() <{level = 10 : i32, message = "bqd,bkd->bqk"}> : () -> ()
    %cst_27 = arith.constant dense<0.000000e+00> : vector<4x8x8xf32>
    %78 = tpu.matmul %73, %75, %cst_27 {dimension_numbers = #tpu.dot_dimension_numbers<[2], [2], [1], [1], [0, 0, 0, 1, 1, 1], [0], [0]>} : vector<4x8x8xbf16>, vector<4x8x8xbf16>, vector<4x8x8xf32> -> vector<4x8x8xf32>
    "tpu.trace_stop"() : () -> ()
    %79 = arith.addf %78, %8 : vector<4x8x8xf32>
    %cst_28 = arith.constant dense<0xFF800000> : vector<4x8xf32>
    %80 = vector.multi_reduction <maximumf>, %79, %cst_28 [2] : vector<4x8x8xf32> to vector<4x8xf32>
    %81 = vector.shape_cast %80 : vector<4x8xf32> to vector<4x8x1xf32>
    %82 = vector.broadcast %81 : vector<4x8x1xf32> to vector<4x8x8xf32>
    %83 = arith.subf %79, %82 : vector<4x8x8xf32>
    %84 = math.exp %83 : vector<4x8x8xf32>
    %cst_29 = arith.constant dense<0.000000e+00> : vector<4x8xf32>
    %85 = vector.multi_reduction <add>, %84, %cst_29 [2] : vector<4x8x8xf32> to vector<4x8xf32>
    %86 = vector.shape_cast %85 : vector<4x8xf32> to vector<4x8x1xf32>
    %87 = tpu.reciprocal %86 {approx = true} : vector<4x8x1xf32> -> vector<4x8x1xf32>
    %88 = vector.broadcast %87 : vector<4x8x1xf32> to vector<4x8x8xf32>
    %89 = arith.mulf %84, %88 : vector<4x8x8xf32>
    %90 = arith.truncf %89 : vector<4x8x8xf32> to vector<4x8x8xbf16>
    "tpu.trace_start"() <{level = 10 : i32, message = "bqk,bkd->bqd"}> : () -> ()
    %cst_30 = arith.constant dense<0.000000e+00> : vector<4x8x8xf32>
    %91 = tpu.matmul %90, %77, %cst_30 {dimension_numbers = #tpu.dot_dimension_numbers<[2], [1], [1], [2], [0, 0, 0, 1, 1, 2], [0], [0]>} : vector<4x8x8xbf16>, vector<4x8x8xbf16>, vector<4x8x8xf32> -> vector<4x8x8xf32>
    "tpu.trace_stop"() : () -> ()
    %c0_31 = arith.constant 0 : index
    %c0_32 = arith.constant 0 : index
    %c24 = arith.constant 24 : index
    %92 = vector.load %arg7[%c0_31, %c0_32, %c24] : memref<4x8x32xf32, #tpu.memory_space<vmem>>, vector<4x8x8xf32>
    tpu.vector_store %arg7[%c0_31, %c0_32, %c24], %91 {strides = array<i32>} : memref<4x8x32xf32, #tpu.memory_space<vmem>>, vector<4x8x8xf32>,
    %c0_33 = arith.constant 0 : index
    %c0_34 = arith.constant 0 : index
    %c0_35 = arith.constant 0 : index
    %93 = vector.load %arg7[%c0_33, %c0_34, %c0_35] : memref<4x8x32xf32, #tpu.memory_space<vmem>>, vector<4x8x32xf32>
    %94 = vector.shape_cast %93 : vector<4x8x32xf32> to vector<32x32xf32>
    %95 = arith.truncf %94 : vector<32x32xf32> to vector<32x32xbf16>
    %c0_36 = arith.constant 0 : index
    %c0_37 = arith.constant 0 : index
    %96 = vector.load %arg4[%c0_36, %c0_37] : memref<32x32xbf16, #tpu.memory_space<vmem>>, vector<32x32xbf16>
    %cst_38 = arith.constant dense<0.000000e+00> : vector<32x32xf32>
    %97 = tpu.matmul %95, %96, %cst_38 {dimension_numbers = #tpu.dot_dimension_numbers<[1], [0], [0], [1], [0, 0, 1, 1], [], []>} : vector<32x32xbf16>, vector<32x32xbf16>, vector<32x32xf32> -> vector<32x32xf32>
    %c0_39 = arith.constant 0 : index
    %c0_40 = arith.constant 0 : index
    %98 = vector.load %arg5[%c0_39, %c0_40] : memref<1x32xf32, #tpu.memory_space<vmem>>, vector<1x32xf32>
    %99 = vector.broadcast %98 : vector<1x32xf32> to vector<32x32xf32>
    %100 = arith.addf %97, %99 : vector<32x32xf32>
    %c0_41 = arith.constant 0 : index
    %c0_42 = arith.constant 0 : index
    %101 = vector.load %arg6[%c0_41, %c0_42] : memref<32x32xf32, #tpu.memory_space<vmem>>, vector<32x32xf32>
    tpu.vector_store %arg6[%c0_41, %c0_42], %100 {strides = array<i32>} : memref<32x32xf32, #tpu.memory_space<vmem>>, vector<32x32xf32>,
    return
  }
}

</mosaic_0001>

<llo_original>
// kernel: tpu_custom_call.1
$region0: #{tpu_custom_call.1}
  #allocation0 [shape = 'u32[]', space=smem, size = 0x4, offset = 0x4, fixed_abs, tag = 'smem constant byte address 0x4 - core index']
  #allocation1 [shape = 'u32[144,128]{1,0:T(1,128)}', space=vmem, size = 0x12000, scoped, tag = 'internal scratch']
  #allocation2 [shape = 'f32[4,8,32]{2,1,0:T(8,128)}', space=vmem, size = 0x4000, scoped, tag = 'scratch operand']
  %s0 = inlined_call_operand.hbm [shape: f32[32,32], index: 0, kind: input, shape index: {}]
  %s1 = inlined_call_operand.hbm [shape: f32[4,8,8], index: 1, kind: input, shape index: {}]
  %s2 = inlined_call_operand.hbm [shape: bf16[32,96], index: 2, kind: input, shape index: {}]
  %s3 = inlined_call_operand.vmem [shape: f32[1,96], index: 3, kind: input, shape index: {}]
  %s4 = inlined_call_operand.hbm [shape: bf16[32,32], index: 4, kind: input, shape index: {}]
  %s5 = inlined_call_operand.vmem [shape: f32[1,32], index: 5, kind: input, shape index: {}]
  %s6 = inlined_call_operand.hbm [shape: f32[32,32], index: 6, kind: output, shape index: {}]
  %s7 = sld [smem:[#allocation0]]
  $region50: #{tpu_custom_call.1} parent=0
    _
  %s9 = ssub.s32 1, %s7
  %s10 = scalar_select 0, %s9, %s7
  $region1: #{tpu_custom_call.1} parent=0
    #allocation3 [shape = 'u8[16384]{0}', space=vmem, size = 0x4000, scoped, tag = 'input window, operand 0, single buffered']
    #allocation4 [shape = 's32[1]{0}', space=sflag, size = 0x4, scoped, tag = 'scoped memory for tpu_custom_call.1']
    #allocation5 [shape = 's32[1]{0}', space=sflag, size = 0x4, scoped, tag = 'scoped memory for tpu_custom_call.1']
    #allocation6 [shape = 'u8[16384]{0}', space=vmem, size = 0x4000, scoped, tag = 'input window, operand 1, single buffered']
    #allocation7 [shape = 's32[1]{0}', space=sflag, size = 0x4, scoped, tag = 'scoped memory for tpu_custom_call.1']
    #allocation8 [shape = 'u8[8192]{0}', space=vmem, size = 0x2000, scoped, tag = 'input window, operand 2, single buffered']
    #allocation9 [shape = 'u8[8192]{0}', space=vmem, size = 0x2000, scoped, tag = 'input window, operand 4, single buffered']
    #allocation10 [shape = 's32[1]{0}', space=sflag, size = 0x4, scoped, tag = 'scoped memory for tpu_custom_call.1']
    #allocation11 [shape = 'u8[16384]{0}', space=vmem, size = 0x4000, scoped, tag = 'output window, operand 0, single buffered']
    %11 = vsyncpa [#allocation4], 0
    %12 = vsyncpa [#allocation7], 0
    %13 = vsyncpa [#allocation10], 0
    %14 = vsyncpa [#allocation5], 0
    // Predicated region
    $region2: #{tpu_custom_call.1} parent=1 // pred_check
      _
    $region3: #{tpu_custom_call.1} parent=1 // pred_check_branch
      %16 = sbr.rel (0) target = $region5
    $region4: #{tpu_custom_call.1} parent=1 // pred_region
      %s18 = ssub.s32 512, 512
      %19 = vsyncadd [#allocation4], %s18
      %s20 = sshll.u32 [#allocation3], 4
      %s21 = int_to_ptr.vmem [resolvable:$true] %s20
      %26 = dma.hbm_to_vmem [thread:$0]  %s0, 512, %s21, [#allocation4], 128, 128, 8
    $region5: #{tpu_custom_call.1} parent=1 // pred_fallthru
      _
    // Predicated region
    $region6: #{tpu_custom_call.1} parent=1 // pred_check
      _
    $region7: #{tpu_custom_call.1} parent=1 // pred_check_branch
      %28 = sbr.rel (0) target = $region9
    $region8: #{tpu_custom_call.1} parent=1 // pred_region
      %s30 = ssub.s32 512, 512
      %31 = vsyncadd [#allocation7], %s30
      %s32 = sshll.u32 [#allocation6], 4
      %s33 = int_to_ptr.vmem [resolvable:$true] %s32
      %38 = dma.hbm_to_vmem [thread:$0]  %s1, 512, %s33, [#allocation7], 128, 128, 8
    $region9: #{tpu_custom_call.1} parent=1 // pred_fallthru
      _
    // Predicated region
    $region10: #{tpu_custom_call.1} parent=1 // pred_check
      _
    $region11: #{tpu_custom_call.1} parent=1 // pred_check_branch
      %40 = sbr.rel (0) target = $region13
    $region12: #{tpu_custom_call.1} parent=1 // pred_region
      %s42 = ssub.s32 256, 256
      %43 = vsyncadd [#allocation7], %s42
      %s44 = sshll.u32 [#allocation8], 4
      %s45 = int_to_ptr.vmem [resolvable:$true] %s44
      %50 = dma.hbm_to_vmem [thread:$0]  %s2, 256, %s45, [#allocation7], 64, 64, 4
    $region13: #{tpu_custom_call.1} parent=1 // pred_fallthru
      _
    // Predicated region
    $region14: #{tpu_custom_call.1} parent=1 // pred_check
      _
    $region15: #{tpu_custom_call.1} parent=1 // pred_check_branch
      %52 = sbr.rel (0) target = $region17
    $region16: #{tpu_custom_call.1} parent=1 // pred_region
      _
    $region17: #{tpu_custom_call.1} parent=1 // pred_fallthru
      _
    // Predicated region
    $region18: #{tpu_custom_call.1} parent=1 // pred_check
      _
    $region19: #{tpu_custom_call.1} parent=1 // pred_check_branch
      %54 = sbr.rel (0) target = $region21
    $region20: #{tpu_custom_call.1} parent=1 // pred_region
      %s56 = ssub.s32 256, 256
      %57 = vsyncadd [#allocation10], %s56
      %s58 = sshll.u32 [#allocation9], 4
      %s59 = int_to_ptr.vmem [resolvable:$true] %s58
      %64 = dma.hbm_to_vmem [thread:$0]  %s4, 256, %s59, [#allocation10], 64, 64, 4
    $region21: #{tpu_custom_call.1} parent=1 // pred_fallthru
      _
    // Predicated region
    $region22: #{tpu_custom_call.1} parent=1 // pred_check
      _
    $region23: #{tpu_custom_call.1} parent=1 // pred_check_branch
      %66 = sbr.rel (0) target = $region25
    $region24: #{tpu_custom_call.1} parent=1 // pred_region
      _
    $region25: #{tpu_custom_call.1} parent=1 // pred_fallthru
      _
    // Predicated region
    $region26: #{tpu_custom_call.1} parent=1 // pred_check
      _
    $region27: #{tpu_custom_call.1} parent=1 // pred_check_branch
      %68 = sbr.rel (0) target = $region29
    $region28: #{tpu_custom_call.1} parent=1 // pred_region
      %69 = dma.done [#allocation4], 512
    $region29: #{tpu_custom_call.1} parent=1 // pred_fallthru
      _
    // Predicated region
    $region30: #{tpu_custom_call.1} parent=1 // pred_check
      _
    $region31: #{tpu_custom_call.1} parent=1 // pred_check_branch
      %71 = sbr.rel (0) target = $region33
    $region32: #{tpu_custom_call.1} parent=1 // pred_region
      %72 = dma.done [#allocation7], 512
    $region33: #{tpu_custom_call.1} parent=1 // pred_fallthru
      _
    // Predicated region
    $region34: #{tpu_custom_call.1} parent=1 // pred_check
      _
    $region35: #{tpu_custom_call.1} parent=1 // pred_check_branch
      %74 = sbr.rel (0) target = $region37
    $region36: #{tpu_custom_call.1} parent=1 // pred_region
      %75 = dma.done [#allocation7], 256
    $region37: #{tpu_custom_call.1} parent=1 // pred_fallthru
      _
    // Predicated region
    $region38: #{tpu_custom_call.1} parent=1 // pred_check
      _
    $region39: #{tpu_custom_call.1} parent=1 // pred_check_branch
      %77 = sbr.rel (0) target = $region41
    $region40: #{tpu_custom_call.1} parent=1 // pred_region
      %78 = dma.done [#allocation10], 256
    $region41: #{tpu_custom_call.1} parent=1 // pred_fallthru
      _
    %v80 = vld [vmem:[#allocation3] sm:$0xff]
    %v81 = vld [vmem:[#allocation3 + $0x8] sm:$0xff]
    %v82 = vld [vmem:[#allocation3 + $0x10] sm:$0xff]
    %v83 = vld [vmem:[#allocation3 + $0x18] sm:$0xff]
    %v84 = vpack.c.bf16 %v81, %v80
    %v85 = vpack.c.bf16 %v83, %v82
    %v86 = vld [vmem:[#allocation8] sm:$0xf]
    %v87 = vld [vmem:[#allocation8 + $0x4] sm:$0xf]
    %v88 = vld [vmem:[#allocation8 + $0x8] sm:$0xf]
    %v89 = vld [vmem:[#allocation8 + $0xc] sm:$0xf]
    %v90 = vld [vmem:[%s3] sm:$0x1]
    %v92 = vlaneseq
    %v93 = vshrl.u32 %v92, 7
    %v94 = vsub.s32 0, %v93
    %v95 = vrot.slane %v90, %v94
    %v101 = vunpack.c.l.b16 %v86
    %v102 = vunpack.c.l.b16 %v87
    %v103 = vunpack.c.l.b16 %v88
    %v104 = vunpack.c.l.b16 %v89
    %v105 = vpack.c.b16 %v102, %v101
    %v106 = vpack.c.b16 %v104, %v103
    %vm109 = vcmask 261120
    %v111 = vsel %vm109, %v84, 0
    %v114 = vsel %vm109, %v85, 0
    %116 = vmatprep.subr.bf16.mxu0 0
    %117 = vmatpush1.bf16.msra.mxu0 %v105
    %118 = vmatprep.subr.bf16.mxu0 0
    %119 = vmatpush1.bf16.msra.mxu0 %v106
    %120 = vmatprep.subr.bf16.mxu0 0
    %121 = vmatpush1.bf16.msra.mxu0 0
    %122 = vmatprep.subr.bf16.mxu0 0
    %123 = vmatpush1.bf16.msra.mxu0 0
    %124 = vmatprep.subr.bf16.mxu0 0
    %125 = vmatpush1.bf16.msra.mxu0 0
    %126 = vmatprep.subr.bf16.mxu0 0
    %127 = vmatpush1.bf16.msra.mxu0 0
    %128 = vmatprep.subr.bf16.mxu0 0
    %129 = vmatpush1.bf16.msra.mxu0 0
    %130 = vmatprep.subr.bf16.mxu0 0
    %131 = vmatpush1.bf16.msra.mxu0 0
    %132 = vmatprep.subr.bf16.mxu0 0
    %133 = vmatpush1.bf16.msra.mxu0 0
    %134 = vmatprep.subr.bf16.mxu0 0
    %135 = vmatpush1.bf16.msra.mxu0 0
    %136 = vmatprep.subr.bf16.mxu0 0
    %137 = vmatpush1.bf16.msra.mxu0 0
    %138 = vmatprep.subr.bf16.mxu0 0
    %139 = vmatpush1.bf16.msra.mxu0 0
    %140 = vmatprep.subr.bf16.mxu0 0
    %141 = vmatpush1.bf16.msra.mxu0 0
    %142 = vmatprep.subr.bf16.mxu0 0
    %143 = vmatpush1.bf16.msra.mxu0 0
    %144 = vmatprep.subr.bf16.mxu0 0
    %145 = vmatpush1.bf16.msra.mxu0 0
    %146 = vmatprep.subr.bf16.mxu0 0
    %147 = vmatpush1.bf16.msra.mxu0 0
    %148 = vmatprep.mubr.bf16.mxu0 0
    %149 = vmatmul.mubr.bf16.gmra.mrb[0].mxu0 %v111
    %v150 = vpop.f32.mrb[0].mxu0
    %v151 = vadd.f32 %v95, %v150
    %v152 = vpop.f32.mrb[0].mxu0
    %v153 = vpop.f32.mrb[0].mxu0
    %v154 = vadd.f32 %v95, %v153
    %v155 = vpop.f32.mrb[0].mxu0
    %156 = vmatprep.mubr.bf16.mxu0 0
    %157 = vmatmul.mubr.bf16.gmra.mrb[0].mxu0 %v114
    %v158 = vpop.f32.mrb[0].mxu0
    %v159 = vadd.f32 %v95, %v158
    %v160 = vpop.f32.mrb[0].mxu0
    %v161 = vpop.f32.mrb[0].mxu0
    %v162 = vadd.f32 %v95, %v161
    %v163 = vpop.f32.mrb[0].mxu0
    %164 = vdwg.mxu0
    %v165 = vld [vmem:[#allocation6] sm:$0xff]
    %v166 = vld [vmem:[#allocation6 + $0x8] sm:$0xff]
    %v167 = vld [vmem:[#allocation6 + $0x10] sm:$0xff]
    %v168 = vld [vmem:[#allocation6 + $0x18] sm:$0xff]
    %v169 = vpack.c.bf16 %v151, %v151
    %v170 = vpack.c.bf16 %v154, %v154
    %v171 = vpack.c.bf16 %v159, %v159
    %v172 = vpack.c.bf16 %v162, %v162
    %174 = vrot.lane.b32.xlu0 %v169, 96
    %v175 = vpop.permute.xlu0 %174
    %vm176 = vcmask 64512
    %v178 = vsel %vm176, %v169, 0
    %v181 = vsel %vm176, %v175, 0
    %183 = vmatprep.subr.bf16.mxu0 0
    %184 = vmatpush1.bf16.xpose.msra.mxu0 %v181
    %185 = vmatprep.subr.bf16.mxu0 0
    %186 = vmatpush1.bf16.xpose.msra.mxu0 0
    %187 = vmatprep.subr.bf16.mxu0 0
    %188 = vmatpush1.bf16.xpose.msra.mxu0 0
    %189 = vmatprep.subr.bf16.mxu0 0
    %190 = vmatpush1.bf16.xpose.msra.mxu0 0
    %191 = vmatprep.subr.bf16.mxu0 0
    %192 = vmatpush1.bf16.xpose.msra.mxu0 0
    %193 = vmatprep.subr.bf16.mxu0 0
    %194 = vmatpush1.bf16.xpose.msra.mxu0 0
    %195 = vmatprep.subr.bf16.mxu0 0
    %196 = vmatpush1.bf16.xpose.msra.mxu0 0
    %197 = vmatprep.subr.bf16.mxu0 0
    %198 = vmatpush1.bf16.xpose.msra.mxu0 0
    %199 = vmatprep.subr.bf16.mxu0 0
    %200 = vmatpush1.bf16.xpose.msra.mxu0 0
    %201 = vmatprep.subr.bf16.mxu0 0
    %202 = vmatpush1.bf16.xpose.msra.mxu0 0
    %203 = vmatprep.subr.bf16.mxu0 0
    %204 = vmatpush1.bf16.xpose.msra.mxu0 0
    %205 = vmatprep.subr.bf16.mxu0 0
    %206 = vmatpush1.bf16.xpose.msra.mxu0 0
    %207 = vmatprep.subr.bf16.mxu0 0
    %208 = vmatpush1.bf16.xpose.msra.mxu0 0
    %209 = vmatprep.subr.bf16.mxu0 0
    %210 = vmatpush1.bf16.xpose.msra.mxu0 0
    %211 = vmatprep.subr.bf16.mxu0 0
    %212 = vmatpush1.bf16.xpose.msra.mxu0 0
    %213 = vmatprep.subr.bf16.mxu0 0
    %214 = vmatpush1.bf16.xpose.msra.mxu0 0
    %215 = vmatprep.mubr.bf16.mxu0 0
    %216 = vmatmul.mubr.bf16.gmra.mrb[0].mxu0 %v178
    %v217 = vpop.f32.mrb[0].mxu0
    %v218 = vadd.f32 %v165, %v217
    %v219 = vpop.f32.mrb[0].mxu0
    %v220 = vpop.f32.mrb[0].mxu0
    %v221 = vpop.f32.mrb[0].mxu0
    %222 = vdwg.mxu0
    %224 = vrot.lane.b32.xlu0 %v170, 96
    %v225 = vpop.permute.xlu0 %224
    %v227 = vsel %vm176, %v170, 0
    %v230 = vsel %vm176, %v225, 0
    %232 = vmatprep.subr.bf16.mxu0 0
    %233 = vmatpush1.bf16.xpose.msra.mxu0 %v230
    %234 = vmatprep.subr.bf16.mxu0 0
    %235 = vmatpush1.bf16.xpose.msra.mxu0 0
    %236 = vmatprep.subr.bf16.mxu0 0
    %237 = vmatpush1.bf16.xpose.msra.mxu0 0
    %238 = vmatprep.subr.bf16.mxu0 0
    %239 = vmatpush1.bf16.xpose.msra.mxu0 0
    %240 = vmatprep.subr.bf16.mxu0 0
    %241 = vmatpush1.bf16.xpose.msra.mxu0 0
    %242 = vmatprep.subr.bf16.mxu0 0
    %243 = vmatpush1.bf16.xpose.msra.mxu0 0
    %244 = vmatprep.subr.bf16.mxu0 0
    %245 = vmatpush1.bf16.xpose.msra.mxu0 0
    %246 = vmatprep.subr.bf16.mxu0 0
    %247 = vmatpush1.bf16.xpose.msra.mxu0 0
    %248 = vmatprep.subr.bf16.mxu0 0
    %249 = vmatpush1.bf16.xpose.msra.mxu0 0
    %250 = vmatprep.subr.bf16.mxu0 0
    %251 = vmatpush1.bf16.xpose.msra.mxu0 0
    %252 = vmatprep.subr.bf16.mxu0 0
    %253 = vmatpush1.bf16.xpose.msra.mxu0 0
    %254 = vmatprep.subr.bf16.mxu0 0
    %255 = vmatpush1.bf16.xpose.msra.mxu0 0
    %256 = vmatprep.subr.bf16.mxu0 0
    %257 = vmatpush1.bf16.xpose.msra.mxu0 0
    %258 = vmatprep.subr.bf16.mxu0 0
    %259 = vmatpush1.bf16.xpose.msra.mxu0 0
    %260 = vmatprep.subr.bf16.mxu0 0
    %261 = vmatpush1.bf16.xpose.msra.mxu0 0
    %262 = vmatprep.subr.bf16.mxu0 0
    %263 = vmatpush1.bf16.xpose.msra.mxu0 0
    %264 = vmatprep.mubr.bf16.mxu0 0
    %265 = vmatmul.mubr.bf16.gmra.mrb[0].mxu0 %v227
    %v266 = vpop.f32.mrb[0].mxu0
    %v267 = vadd.f32 %v166, %v266
    %v268 = vpop.f32.mrb[0].mxu0
    %v269 = vpop.f32.mrb[0].mxu0
    %v270 = vpop.f32.mrb[0].mxu0
    %271 = vdwg.mxu0
    %273 = vrot.lane.b32.xlu0 %v171, 96
    %v274 = vpop.permute.xlu0 %273
    %v276 = vsel %vm176, %v171, 0
    %v279 = vsel %vm176, %v274, 0
    %281 = vmatprep.subr.bf16.mxu0 0
    %282 = vmatpush1.bf16.xpose.msra.mxu0 %v279
    %283 = vmatprep.subr.bf16.mxu0 0
    %284 = vmatpush1.bf16.xpose.msra.mxu0 0
    %285 = vmatprep.subr.bf16.mxu0 0
    %286 = vmatpush1.bf16.xpose.msra.mxu0 0
    %287 = vmatprep.subr.bf16.mxu0 0
    %288 = vmatpush1.bf16.xpose.msra.mxu0 0
    %289 = vmatprep.subr.bf16.mxu0 0
    %290 = vmatpush1.bf16.xpose.msra.mxu0 0
    %291 = vmatprep.subr.bf16.mxu0 0
    %292 = vmatpush1.bf16.xpose.msra.mxu0 0
    %293 = vmatprep.subr.bf16.mxu0 0
    %294 = vmatpush1.bf16.xpose.msra.mxu0 0
    %295 = vmatprep.subr.bf16.mxu0 0
    %296 = vmatpush1.bf16.xpose.msra.mxu0 0
    %297 = vmatprep.subr.bf16.mxu0 0
    %298 = vmatpush1.bf16.xpose.msra.mxu0 0
    %299 = vmatprep.subr.bf16.mxu0 0
    %300 = vmatpush1.bf16.xpose.msra.mxu0 0
    %301 = vmatprep.subr.bf16.mxu0 0
    %302 = vmatpush1.bf16.xpose.msra.mxu0 0
    %303 = vmatprep.subr.bf16.mxu0 0
    %304 = vmatpush1.bf16.xpose.msra.mxu0 0
    %305 = vmatprep.subr.bf16.mxu0 0
    %306 = vmatpush1.bf16.xpose.msra.mxu0 0
    %307 = vmatprep.subr.bf16.mxu0 0
    %308 = vmatpush1.bf16.xpose.msra.mxu0 0
    %309 = vmatprep.subr.bf16.mxu0 0
    %310 = vmatpush1.bf16.xpose.msra.mxu0 0
    %311 = vmatprep.subr.bf16.mxu0 0
    %312 = vmatpush1.bf16.xpose.msra.mxu0 0
    %313 = vmatprep.mubr.bf16.mxu0 0
    %314 = vmatmul.mubr.bf16.gmra.mrb[0].mxu0 %v276
    %v315 = vpop.f32.mrb[0].mxu0
    %v316 = vadd.f32 %v167, %v315
    %v317 = vpop.f32.mrb[0].mxu0
    %v318 = vpop.f32.mrb[0].mxu0
    %v319 = vpop.f32.mrb[0].mxu0
    %320 = vdwg.mxu0
    %322 = vrot.lane.b32.xlu0 %v172, 96
    %v323 = vpop.permute.xlu0 %322
    %v325 = vsel %vm176, %v172, 0
    %v328 = vsel %vm176, %v323, 0
    %330 = vmatprep.subr.bf16.mxu0 0
    %331 = vmatpush1.bf16.xpose.msra.mxu0 %v328
    %332 = vmatprep.subr.bf16.mxu0 0
    %333 = vmatpush1.bf16.xpose.msra.mxu0 0
    %334 = vmatprep.subr.bf16.mxu0 0
    %335 = vmatpush1.bf16.xpose.msra.mxu0 0
    %336 = vmatprep.subr.bf16.mxu0 0
    %337 = vmatpush1.bf16.xpose.msra.mxu0 0
    %338 = vmatprep.subr.bf16.mxu0 0
    %339 = vmatpush1.bf16.xpose.msra.mxu0 0
    %340 = vmatprep.subr.bf16.mxu0 0
    %341 = vmatpush1.bf16.xpose.msra.mxu0 0
    %342 = vmatprep.subr.bf16.mxu0 0
    %343 = vmatpush1.bf16.xpose.msra.mxu0 0
    %344 = vmatprep.subr.bf16.mxu0 0
    %345 = vmatpush1.bf16.xpose.msra.mxu0 0
    %346 = vmatprep.subr.bf16.mxu0 0
    %347 = vmatpush1.bf16.xpose.msra.mxu0 0
    %348 = vmatprep.subr.bf16.mxu0 0
    %349 = vmatpush1.bf16.xpose.msra.mxu0 0
    %350 = vmatprep.subr.bf16.mxu0 0
    %351 = vmatpush1.bf16.xpose.msra.mxu0 0
    %352 = vmatprep.subr.bf16.mxu0 0
    %353 = vmatpush1.bf16.xpose.msra.mxu0 0
    %354 = vmatprep.subr.bf16.mxu0 0
    %355 = vmatpush1.bf16.xpose.msra.mxu0 0
    %356 = vmatprep.subr.bf16.mxu0 0
    %357 = vmatpush1.bf16.xpose.msra.mxu0 0
    %358 = vmatprep.subr.bf16.mxu0 0
    %359 = vmatpush1.bf16.xpose.msra.mxu0 0
    %360 = vmatprep.subr.bf16.mxu0 0
    %361 = vmatpush1.bf16.xpose.msra.mxu0 0
    %362 = vmatprep.mubr.bf16.mxu0 0
    %363 = vmatmul.mubr.bf16.gmra.mrb[0].mxu0 %v325
    %v364 = vpop.f32.mrb[0].mxu0
    %v365 = vadd.f32 %v168, %v364
    %v366 = vpop.f32.mrb[0].mxu0
    %v367 = vpop.f32.mrb[0].mxu0
    %v368 = vpop.f32.mrb[0].mxu0
    %369 = vdwg.mxu0
    %v370 = vsel %vm176, %v218, -inf
    %371 = vmax.xlane.f32.xlu0 %v370
    %v372 = vpop.xlane.xlu0 %371
    %v373 = vsel %vm176, %v267, -inf
    %374 = vmax.xlane.f32.xlu0 %v373
    %v375 = vpop.xlane.xlu0 %374
    %v376 = vsel %vm176, %v316, -inf
    %377 = vmax.xlane.f32.xlu0 %v376
    %v378 = vpop.xlane.xlu0 %377
    %v379 = vsel %vm176, %v365, -inf
    %380 = vmax.xlane.f32.xlu0 %v379
    %v381 = vpop.xlane.xlu0 %380
    %v382 = vsub.f32 %v218, %v372
    %v383 = vsub.f32 %v267, %v375
    %v384 = vsub.f32 %v316, %v378
    %v385 = vsub.f32 %v365, %v381
    %v386 = vmul.f32 %v382, 1.442695
    %v387 = vpow.pop %v386
    %v388 = vmul.f32 %v383, 1.442695
    %v389 = vpow.pop %v388
    %v390 = vmul.f32 %v384, 1.442695
    %v391 = vpow.pop %v390
    %v392 = vmul.f32 %v385, 1.442695
    %v393 = vpow.pop %v392
    %v394 = vsel %vm176, %v387, 0.0
    %395 = vadd.xlane.f32.xlu0 %v394
    %v396 = vpop.xlane.xlu0 %395
    %v397 = vsel %vm176, %v389, 0.0
    %398 = vadd.xlane.f32.xlu0 %v397
    %v399 = vpop.xlane.xlu0 %398
    %v400 = vsel %vm176, %v391, 0.0
    %401 = vadd.xlane.f32.xlu0 %v400
    %v402 = vpop.xlane.xlu0 %401
    %v403 = vsel %vm176, %v393, 0.0
    %404 = vadd.xlane.f32.xlu0 %v403
    %v405 = vpop.xlane.xlu0 %404
    %v406 = vrcp.pop %v396
    %v407 = vrcp.pop %v399
    %v408 = vrcp.pop %v402
    %v409 = vrcp.pop %v405
    %v410 = vmul.f32 %v387, %v406
    %v411 = vmul.f32 %v389, %v407
    %v412 = vmul.f32 %v391, %v408
    %v413 = vmul.f32 %v393, %v409
    %v414 = vpack.c.bf16 %v410, %v410
    %v415 = vpack.c.bf16 %v411, %v411
    %v416 = vpack.c.bf16 %v412, %v412
    %v417 = vpack.c.bf16 %v413, %v413
    %418 = vrot.lane.b32.xlu0 %v169, 64
    %v419 = vpop.permute.xlu0 %418
    %v421 = vsel %vm176, %v414, 0
    %vm423 = vcmask 1043456
    %v425 = vsel %vm423, %v419, 0
    %427 = vmatprep.subr.bf16.mxu0 0
    %428 = vmatpush1.bf16.msra.mxu0 %v425
    %429 = vmatprep.subr.bf16.mxu0 0
    %430 = vmatpush1.bf16.msra.mxu0 0
    %431 = vmatprep.subr.bf16.mxu0 0
    %432 = vmatpush1.bf16.msra.mxu0 0
    %433 = vmatprep.subr.bf16.mxu0 0
    %434 = vmatpush1.bf16.msra.mxu0 0
    %435 = vmatprep.subr.bf16.mxu0 0
    %436 = vmatpush1.bf16.msra.mxu0 0
    %437 = vmatprep.subr.bf16.mxu0 0
    %438 = vmatpush1.bf16.msra.mxu0 0
    %439 = vmatprep.subr.bf16.mxu0 0
    %440 = vmatpush1.bf16.msra.mxu0 0
    %441 = vmatprep.subr.bf16.mxu0 0
    %442 = vmatpush1.bf16.msra.mxu0 0
    %443 = vmatprep.subr.bf16.mxu0 0
    %444 = vmatpush1.bf16.msra.mxu0 0
    %445 = vmatprep.subr.bf16.mxu0 0
    %446 = vmatpush1.bf16.msra.mxu0 0
    %447 = vmatprep.subr.bf16.mxu0 0
    %448 = vmatpush1.bf16.msra.mxu0 0
    %449 = vmatprep.subr.bf16.mxu0 0
    %450 = vmatpush1.bf16.msra.mxu0 0
    %451 = vmatprep.subr.bf16.mxu0 0
    %452 = vmatpush1.bf16.msra.mxu0 0
    %453 = vmatprep.subr.bf16.mxu0 0
    %454 = vmatpush1.bf16.msra.mxu0 0
    %455 = vmatprep.subr.bf16.mxu0 0
    %456 = vmatpush1.bf16.msra.mxu0 0
    %457 = vmatprep.subr.bf16.mxu0 0
    %458 = vmatpush1.bf16.msra.mxu0 0
    %459 = vmatprep.mubr.bf16.mxu0 0
    %460 = vmatmul.mubr.bf16.gmra.mrb[0].mxu0 %v421
    %v461 = vpop.f32.mrb[0].mxu0
    %v462 = vadd.f32 0.0, %v461
    %v463 = vpop.f32.mrb[0].mxu0
    %v464 = vpop.f32.mrb[0].mxu0
    %v465 = vpop.f32.mrb[0].mxu0
    %466 = vdwg.mxu0
    %467 = vrot.lane.b32.xlu0 %v170, 64
    %v468 = vpop.permute.xlu0 %467
    %v470 = vsel %vm176, %v415, 0
    %v473 = vsel %vm423, %v468, 0
    %475 = vmatprep.subr.bf16.mxu0 0
    %476 = vmatpush1.bf16.msra.mxu0 %v473
    %477 = vmatprep.subr.bf16.mxu0 0
    %478 = vmatpush1.bf16.msra.mxu0 0
    %479 = vmatprep.subr.bf16.mxu0 0
    %480 = vmatpush1.bf16.msra.mxu0 0
    %481 = vmatprep.subr.bf16.mxu0 0
    %482 = vmatpush1.bf16.msra.mxu0 0
    %483 = vmatprep.subr.bf16.mxu0 0
    %484 = vmatpush1.bf16.msra.mxu0 0
    %485 = vmatprep.subr.bf16.mxu0 0
    %486 = vmatpush1.bf16.msra.mxu0 0
    %487 = vmatprep.subr.bf16.mxu0 0
    %488 = vmatpush1.bf16.msra.mxu0 0
    %489 = vmatprep.subr.bf16.mxu0 0
    %490 = vmatpush1.bf16.msra.mxu0 0
    %491 = vmatprep.subr.bf16.mxu0 0
    %492 = vmatpush1.bf16.msra.mxu0 0
    %493 = vmatprep.subr.bf16.mxu0 0
    %494 = vmatpush1.bf16.msra.mxu0 0
    %495 = vmatprep.subr.bf16.mxu0 0
    %496 = vmatpush1.bf16.msra.mxu0 0
    %497 = vmatprep.subr.bf16.mxu0 0
    %498 = vmatpush1.bf16.msra.mxu0 0
    %499 = vmatprep.subr.bf16.mxu0 0
    %500 = vmatpush1.bf16.msra.mxu0 0
    %501 = vmatprep.subr.bf16.mxu0 0
    %502 = vmatpush1.bf16.msra.mxu0 0
    %503 = vmatprep.subr.bf16.mxu0 0
    %504 = vmatpush1.bf16.msra.mxu0 0
    %505 = vmatprep.subr.bf16.mxu0 0
    %506 = vmatpush1.bf16.msra.mxu0 0
    %507 = vmatprep.mubr.bf16.mxu0 0
    %508 = vmatmul.mubr.bf16.gmra.mrb[0].mxu0 %v470
    %v509 = vpop.f32.mrb[0].mxu0
    %v510 = vadd.f32 0.0, %v509
    %v511 = vpop.f32.mrb[0].mxu0
    %v512 = vpop.f32.mrb[0].mxu0
    %v513 = vpop.f32.mrb[0].mxu0
    %514 = vdwg.mxu0
    %515 = vrot.lane.b32.xlu0 %v171, 64
    %v516 = vpop.permute.xlu0 %515
    %v518 = vsel %vm176, %v416, 0
    %v521 = vsel %vm423, %v516, 0
    %523 = vmatprep.subr.bf16.mxu0 0
    %524 = vmatpush1.bf16.msra.mxu0 %v521
    %525 = vmatprep.subr.bf16.mxu0 0
    %526 = vmatpush1.bf16.msra.mxu0 0
    %527 = vmatprep.subr.bf16.mxu0 0
    %528 = vmatpush1.bf16.msra.mxu0 0
    %529 = vmatprep.subr.bf16.mxu0 0
    %530 = vmatpush1.bf16.msra.mxu0 0
    %531 = vmatprep.subr.bf16.mxu0 0
    %532 = vmatpush1.bf16.msra.mxu0 0
    %533 = vmatprep.subr.bf16.mxu0 0
    %534 = vmatpush1.bf16.msra.mxu0 0
    %535 = vmatprep.subr.bf16.mxu0 0
    %536 = vmatpush1.bf16.msra.mxu0 0
    %537 = vmatprep.subr.bf16.mxu0 0
    %538 = vmatpush1.bf16.msra.mxu0 0
    %539 = vmatprep.subr.bf16.mxu0 0
    %540 = vmatpush1.bf16.msra.mxu0 0
    %541 = vmatprep.subr.bf16.mxu0 0
    %542 = vmatpush1.bf16.msra.mxu0 0
    %543 = vmatprep.subr.bf16.mxu0 0
    %544 = vmatpush1.bf16.msra.mxu0 0
    %545 = vmatprep.subr.bf16.mxu0 0
    %546 = vmatpush1.bf16.msra.mxu0 0
    %547 = vmatprep.subr.bf16.mxu0 0
    %548 = vmatpush1.bf16.msra.mxu0 0
    %549 = vmatprep.subr.bf16.mxu0 0
    %550 = vmatpush1.bf16.msra.mxu0 0
    %551 = vmatprep.subr.bf16.mxu0 0
    %552 = vmatpush1.bf16.msra.mxu0 0
    %553 = vmatprep.subr.bf16.mxu0 0
    %554 = vmatpush1.bf16.msra.mxu0 0
    %555 = vmatprep.mubr.bf16.mxu0 0
    %556 = vmatmul.mubr.bf16.gmra.mrb[0].mxu0 %v518
    %v557 = vpop.f32.mrb[0].mxu0
    %v558 = vadd.f32 0.0, %v557
    %v559 = vpop.f32.mrb[0].mxu0
    %v560 = vpop.f32.mrb[0].mxu0
    %v561 = vpop.f32.mrb[0].mxu0
    %562 = vdwg.mxu0
    %563 = vrot.lane.b32.xlu0 %v172, 64
    %v564 = vpop.permute.xlu0 %563
    %v566 = vsel %vm176, %v417, 0
    %v569 = vsel %vm423, %v564, 0
    %571 = vmatprep.subr.bf16.mxu0 0
    %572 = vmatpush1.bf16.msra.mxu0 %v569
    %573 = vmatprep.subr.bf16.mxu0 0
    %574 = vmatpush1.bf16.msra.mxu0 0
    %575 = vmatprep.subr.bf16.mxu0 0
    %576 = vmatpush1.bf16.msra.mxu0 0
    %577 = vmatprep.subr.bf16.mxu0 0
    %578 = vmatpush1.bf16.msra.mxu0 0
    %579 = vmatprep.subr.bf16.mxu0 0
    %580 = vmatpush1.bf16.msra.mxu0 0
    %581 = vmatprep.subr.bf16.mxu0 0
    %582 = vmatpush1.bf16.msra.mxu0 0
    %583 = vmatprep.subr.bf16.mxu0 0
    %584 = vmatpush1.bf16.msra.mxu0 0
    %585 = vmatprep.subr.bf16.mxu0 0
    %586 = vmatpush1.bf16.msra.mxu0 0
    %587 = vmatprep.subr.bf16.mxu0 0
    %588 = vmatpush1.bf16.msra.mxu0 0
    %589 = vmatprep.subr.bf16.mxu0 0
    %590 = vmatpush1.bf16.msra.mxu0 0
    %591 = vmatprep.subr.bf16.mxu0 0
    %592 = vmatpush1.bf16.msra.mxu0 0
    %593 = vmatprep.subr.bf16.mxu0 0
    %594 = vmatpush1.bf16.msra.mxu0 0
    %595 = vmatprep.subr.bf16.mxu0 0
    %596 = vmatpush1.bf16.msra.mxu0 0
    %597 = vmatprep.subr.bf16.mxu0 0
    %598 = vmatpush1.bf16.msra.mxu0 0
    %599 = vmatprep.subr.bf16.mxu0 0
    %600 = vmatpush1.bf16.msra.mxu0 0
    %601 = vmatprep.subr.bf16.mxu0 0
    %602 = vmatpush1.bf16.msra.mxu0 0
    %603 = vmatprep.mubr.bf16.mxu0 0
    %604 = vmatmul.mubr.bf16.gmra.mrb[0].mxu0 %v566
    %v605 = vpop.f32.mrb[0].mxu0
    %v606 = vadd.f32 0.0, %v605
    %v607 = vpop.f32.mrb[0].mxu0
    %v608 = vpop.f32.mrb[0].mxu0
    %v609 = vpop.f32.mrb[0].mxu0
    %610 = vdwg.mxu0
    %611 = vst.msk [vmem:[#allocation2] sm:$0xff] %vm176, %v462
    %612 = vst.msk [vmem:[#allocation2 + $0x8] sm:$0xff] %vm176, %v510
    %613 = vst.msk [vmem:[#allocation2 + $0x10] sm:$0xff] %vm176, %v558
    %614 = vst.msk [vmem:[#allocation2 + $0x18] sm:$0xff] %vm176, %v606
    %615 = vrot.lane.b32.xlu0 %v169, 120
    %v616 = vpop.permute.xlu0 %615
    %617 = vrot.lane.b32.xlu0 %v169, 88
    %v618 = vpop.permute.xlu0 %617
    %v620 = vsel %vm176, %v616, 0
    %v623 = vsel %vm176, %v618, 0
    %625 = vmatprep.subr.bf16.mxu0 0
    %626 = vmatpush1.bf16.xpose.msra.mxu0 %v623
    %627 = vmatprep.subr.bf16.mxu0 0
    %628 = vmatpush1.bf16.xpose.msra.mxu0 0
    %629 = vmatprep.subr.bf16.mxu0 0
    %630 = vmatpush1.bf16.xpose.msra.mxu0 0
    %631 = vmatprep.subr.bf16.mxu0 0
    %632 = vmatpush1.bf16.xpose.msra.mxu0 0
    %633 = vmatprep.subr.bf16.mxu0 0
    %634 = vmatpush1.bf16.xpose.msra.mxu0 0
    %635 = vmatprep.subr.bf16.mxu0 0
    %636 = vmatpush1.bf16.xpose.msra.mxu0 0
    %637 = vmatprep.subr.bf16.mxu0 0
    %638 = vmatpush1.bf16.xpose.msra.mxu0 0
    %639 = vmatprep.subr.bf16.mxu0 0
    %640 = vmatpush1.bf16.xpose.msra.mxu0 0
    %641 = vmatprep.subr.bf16.mxu0 0
    %642 = vmatpush1.bf16.xpose.msra.mxu0 0
    %643 = vmatprep.subr.bf16.mxu0 0
    %644 = vmatpush1.bf16.xpose.msra.mxu0 0
    %645 = vmatprep.subr.bf16.mxu0 0
    %646 = vmatpush1.bf16.xpose.msra.mxu0 0
    %647 = vmatprep.subr.bf16.mxu0 0
    %648 = vmatpush1.bf16.xpose.msra.mxu0 0
    %649 = vmatprep.subr.bf16.mxu0 0
    %650 = vmatpush1.bf16.xpose.msra.mxu0 0
    %651 = vmatprep.subr.bf16.mxu0 0
    %652 = vmatpush1.bf16.xpose.msra.mxu0 0
    %653 = vmatprep.subr.bf16.mxu0 0
    %654 = vmatpush1.bf16.xpose.msra.mxu0 0
    %655 = vmatprep.subr.bf16.mxu0 0
    %656 = vmatpush1.bf16.xpose.msra.mxu0 0
    %657 = vmatprep.mubr.bf16.mxu0 0
    %658 = vmatmul.mubr.bf16.gmra.mrb[0].mxu0 %v620
    %v659 = vpop.f32.mrb[0].mxu0
    %v660 = vadd.f32 %v165, %v659
    %v661 = vpop.f32.mrb[0].mxu0
    %v662 = vpop.f32.mrb[0].mxu0
    %v663 = vpop.f32.mrb[0].mxu0
    %664 = vdwg.mxu0
    %665 = vrot.lane.b32.xlu0 %v170, 120
    %v666 = vpop.permute.xlu0 %665
    %667 = vrot.lane.b32.xlu0 %v170, 88
    %v668 = vpop.permute.xlu0 %667
    %v670 = vsel %vm176, %v666, 0
    %v673 = vsel %vm176, %v668, 0
    %675 = vmatprep.subr.bf16.mxu0 0
    %676 = vmatpush1.bf16.xpose.msra.mxu0 %v673
    %677 = vmatprep.subr.bf16.mxu0 0
    %678 = vmatpush1.bf16.xpose.msra.mxu0 0
    %679 = vmatprep.subr.bf16.mxu0 0
    %680 = vmatpush1.bf16.xpose.msra.mxu0 0
    %681 = vmatprep.subr.bf16.mxu0 0
    %682 = vmatpush1.bf16.xpose.msra.mxu0 0
    %683 = vmatprep.subr.bf16.mxu0 0
    %684 = vmatpush1.bf16.xpose.msra.mxu0 0
    %685 = vmatprep.subr.bf16.mxu0 0
    %686 = vmatpush1.bf16.xpose.msra.mxu0 0
    %687 = vmatprep.subr.bf16.mxu0 0
    %688 = vmatpush1.bf16.xpose.msra.mxu0 0
    %689 = vmatprep.subr.bf16.mxu0 0
    %690 = vmatpush1.bf16.xpose.msra.mxu0 0
    %691 = vmatprep.subr.bf16.mxu0 0
    %692 = vmatpush1.bf16.xpose.msra.mxu0 0
    %693 = vmatprep.subr.bf16.mxu0 0
    %694 = vmatpush1.bf16.xpose.msra.mxu0 0
    %695 = vmatprep.subr.bf16.mxu0 0
    %696 = vmatpush1.bf16.xpose.msra.mxu0 0
    %697 = vmatprep.subr.bf16.mxu0 0
    %698 = vmatpush1.bf16.xpose.msra.mxu0 0
    %699 = vmatprep.subr.bf16.mxu0 0
    %700 = vmatpush1.bf16.xpose.msra.mxu0 0
    %701 = vmatprep.subr.bf16.mxu0 0
    %702 = vmatpush1.bf16.xpose.msra.mxu0 0
    %703 = vmatprep.subr.bf16.mxu0 0
    %704 = vmatpush1.bf16.xpose.msra.mxu0 0
    %705 = vmatprep.subr.bf16.mxu0 0
    %706 = vmatpush1.bf16.xpose.msra.mxu0 0
    %707 = vmatprep.mubr.bf16.mxu0 0
    %708 = vmatmul.mubr.bf16.gmra.mrb[0].mxu0 %v670
    %v709 = vpop.f32.mrb[0].mxu0
    %v710 = vadd.f32 %v166, %v709
    %v711 = vpop.f32.mrb[0].mxu0
    %v712 = vpop.f32.mrb[0].mxu0
    %v713 = vpop.f32.mrb[0].mxu0
    %714 = vdwg.mxu0
    %715 = vrot.lane.b32.xlu0 %v171, 120
    %v716 = vpop.permute.xlu0 %715
    %717 = vrot.lane.b32.xlu0 %v171, 88
    %v718 = vpop.permute.xlu0 %717
    %v720 = vsel %vm176, %v716, 0
    %v723 = vsel %vm176, %v718, 0
    %725 = vmatprep.subr.bf16.mxu0 0
    %726 = vmatpush1.bf16.xpose.msra.mxu0 %v723
    %727 = vmatprep.subr.bf16.mxu0 0
    %728 = vmatpush1.bf16.xpose.msra.mxu0 0
    %729 = vmatprep.subr.bf16.mxu0 0
    %730 = vmatpush1.bf16.xpose.msra.mxu0 0
    %731 = vmatprep.subr.bf16.mxu0 0
    %732 = vmatpush1.bf16.xpose.msra.mxu0 0
    %733 = vmatprep.subr.bf16.mxu0 0
    %734 = vmatpush1.bf16.xpose.msra.mxu0 0
    %735 = vmatprep.subr.bf16.mxu0 0
    %736 = vmatpush1.bf16.xpose.msra.mxu0 0
    %737 = vmatprep.subr.bf16.mxu0 0
    %738 = vmatpush1.bf16.xpose.msra.mxu0 0
    %739 = vmatprep.subr.bf16.mxu0 0
    %740 = vmatpush1.bf16.xpose.msra.mxu0 0
    %741 = vmatprep.subr.bf16.mxu0 0
    %742 = vmatpush1.bf16.xpose.msra.mxu0 0
    %743 = vmatprep.subr.bf16.mxu0 0
    %744 = vmatpush1.bf16.xpose.msra.mxu0 0
    %745 = vmatprep.subr.bf16.mxu0 0
    %746 = vmatpush1.bf16.xpose.msra.mxu0 0
    %747 = vmatprep.subr.bf16.mxu0 0
    %748 = vmatpush1.bf16.xpose.msra.mxu0 0
    %749 = vmatprep.subr.bf16.mxu0 0
    %750 = vmatpush1.bf16.xpose.msra.mxu0 0
    %751 = vmatprep.subr.bf16.mxu0 0
    %752 = vmatpush1.bf16.xpose.msra.mxu0 0
    %753 = vmatprep.subr.bf16.mxu0 0
    %754 = vmatpush1.bf16.xpose.msra.mxu0 0
    %755 = vmatprep.subr.bf16.mxu0 0
    %756 = vmatpush1.bf16.xpose.msra.mxu0 0
    %757 = vmatprep.mubr.bf16.mxu0 0
    %758 = vmatmul.mubr.bf16.gmra.mrb[0].mxu0 %v720
    %v759 = vpop.f32.mrb[0].mxu0
    %v760 = vadd.f32 %v167, %v759
    %v761 = vpop.f32.mrb[0].mxu0
    %v762 = vpop.f32.mrb[0].mxu0
    %v763 = vpop.f32.mrb[0].mxu0
    %764 = vdwg.mxu0
    %765 = vrot.lane.b32.xlu0 %v172, 120
    %v766 = vpop.permute.xlu0 %765
    %767 = vrot.lane.b32.xlu0 %v172, 88
    %v768 = vpop.permute.xlu0 %767
    %v770 = vsel %vm176, %v766, 0
    %v773 = vsel %vm176, %v768, 0
    %775 = vmatprep.subr.bf16.mxu0 0
    %776 = vmatpush1.bf16.xpose.msra.mxu0 %v773
    %777 = vmatprep.subr.bf16.mxu0 0
    %778 = vmatpush1.bf16.xpose.msra.mxu0 0
    %779 = vmatprep.subr.bf16.mxu0 0
    %780 = vmatpush1.bf16.xpose.msra.mxu0 0
    %781 = vmatprep.subr.bf16.mxu0 0
    %782 = vmatpush1.bf16.xpose.msra.mxu0 0
    %783 = vmatprep.subr.bf16.mxu0 0
    %784 = vmatpush1.bf16.xpose.msra.mxu0 0
    %785 = vmatprep.subr.bf16.mxu0 0
    %786 = vmatpush1.bf16.xpose.msra.mxu0 0
    %787 = vmatprep.subr.bf16.mxu0 0
    %788 = vmatpush1.bf16.xpose.msra.mxu0 0
    %789 = vmatprep.subr.bf16.mxu0 0
    %790 = vmatpush1.bf16.xpose.msra.mxu0 0
    %791 = vmatprep.subr.bf16.mxu0 0
    %792 = vmatpush1.bf16.xpose.msra.mxu0 0
    %793 = vmatprep.subr.bf16.mxu0 0
    %794 = vmatpush1.bf16.xpose.msra.mxu0 0
    %795 = vmatprep.subr.bf16.mxu0 0
    %796 = vmatpush1.bf16.xpose.msra.mxu0 0
    %797 = vmatprep.subr.bf16.mxu0 0
    %798 = vmatpush1.bf16.xpose.msra.mxu0 0
    %799 = vmatprep.subr.bf16.mxu0 0
    %800 = vmatpush1.bf16.xpose.msra.mxu0 0
    %801 = vmatprep.subr.bf16.mxu0 0
    %802 = vmatpush1.bf16.xpose.msra.mxu0 0
    %803 = vmatprep.subr.bf16.mxu0 0
    %804 = vmatpush1.bf16.xpose.msra.mxu0 0
    %805 = vmatprep.subr.bf16.mxu0 0
    %806 = vmatpush1.bf16.xpose.msra.mxu0 0
    %807 = vmatprep.mubr.bf16.mxu0 0
    %808 = vmatmul.mubr.bf16.gmra.mrb[0].mxu0 %v770
    %v809 = vpop.f32.mrb[0].mxu0
    %v810 = vadd.f32 %v168, %v809
    %v811 = vpop.f32.mrb[0].mxu0
    %v812 = vpop.f32.mrb[0].mxu0
    %v813 = vpop.f32.mrb[0].mxu0
    %814 = vdwg.mxu0
    %v815 = vsel %vm176, %v660, -inf
    %816 = vmax.xlane.f32.xlu0 %v815
    %v817 = vpop.xlane.xlu0 %816
    %v818 = vsel %vm176, %v710, -inf
    %819 = vmax.xlane.f32.xlu0 %v818
    %v820 = vpop.xlane.xlu0 %819
    %v821 = vsel %vm176, %v760, -inf
    %822 = vmax.xlane.f32.xlu0 %v821
    %v823 = vpop.xlane.xlu0 %822
    %v824 = vsel %vm176, %v810, -inf
    %825 = vmax.xlane.f32.xlu0 %v824
    %v826 = vpop.xlane.xlu0 %825
    %v827 = vsub.f32 %v660, %v817
    %v828 = vsub.f32 %v710, %v820
    %v829 = vsub.f32 %v760, %v823
    %v830 = vsub.f32 %v810, %v826
    %v831 = vmul.f32 %v827, 1.442695
    %v832 = vpow.pop %v831
    %v833 = vmul.f32 %v828, 1.442695
    %v834 = vpow.pop %v833
    %v835 = vmul.f32 %v829, 1.442695
    %v836 = vpow.pop %v835
    %v837 = vmul.f32 %v830, 1.442695
    %v838 = vpow.pop %v837
    %v839 = vsel %vm176, %v832, 0.0
    %840 = vadd.xlane.f32.xlu0 %v839
    %v841 = vpop.xlane.xlu0 %840
    %v842 = vsel %vm176, %v834, 0.0
    %843 = vadd.xlane.f32.xlu0 %v842
    %v844 = vpop.xlane.xlu0 %843
    %v845 = vsel %vm176, %v836, 0.0
    %846 = vadd.xlane.f32.xlu0 %v845
    %v847 = vpop.xlane.xlu0 %846
    %v848 = vsel %vm176, %v838, 0.0
    %849 = vadd.xlane.f32.xlu0 %v848
    %v850 = vpop.xlane.xlu0 %849
    %v851 = vrcp.pop %v841
    %v852 = vrcp.pop %v844
    %v853 = vrcp.pop %v847
    %v854 = vrcp.pop %v850
    %v855 = vmul.f32 %v832, %v851
    %v856 = vmul.f32 %v834, %v852
    %v857 = vmul.f32 %v836, %v853
    %v858 = vmul.f32 %v838, %v854
    %v859 = vpack.c.bf16 %v855, %v855
    %v860 = vpack.c.bf16 %v856, %v856
    %v861 = vpack.c.bf16 %v857, %v857
    %v862 = vpack.c.bf16 %v858, %v858
    %863 = vrot.lane.b32.xlu0 %v169, 56
    %v864 = vpop.permute.xlu0 %863
    %v866 = vsel %vm176, %v859, 0
    %v869 = vsel %vm423, %v864, 0
    %871 = vmatprep.subr.bf16.mxu0 0
    %872 = vmatpush1.bf16.msra.mxu0 %v869
    %873 = vmatprep.subr.bf16.mxu0 0
    %874 = vmatpush1.bf16.msra.mxu0 0
    %875 = vmatprep.subr.bf16.mxu0 0
    %876 = vmatpush1.bf16.msra.mxu0 0
    %877 = vmatprep.subr.bf16.mxu0 0
    %878 = vmatpush1.bf16.msra.mxu0 0
    %879 = vmatprep.subr.bf16.mxu0 0
    %880 = vmatpush1.bf16.msra.mxu0 0
    %881 = vmatprep.subr.bf16.mxu0 0
    %882 = vmatpush1.bf16.msra.mxu0 0
    %883 = vmatprep.subr.bf16.mxu0 0
    %884 = vmatpush1.bf16.msra.mxu0 0
    %885 = vmatprep.subr.bf16.mxu0 0
    %886 = vmatpush1.bf16.msra.mxu0 0
    %887 = vmatprep.subr.bf16.mxu0 0
    %888 = vmatpush1.bf16.msra.mxu0 0
    %889 = vmatprep.subr.bf16.mxu0 0
    %890 = vmatpush1.bf16.msra.mxu0 0
    %891 = vmatprep.subr.bf16.mxu0 0
    %892 = vmatpush1.bf16.msra.mxu0 0
    %893 = vmatprep.subr.bf16.mxu0 0
    %894 = vmatpush1.bf16.msra.mxu0 0
    %895 = vmatprep.subr.bf16.mxu0 0
    %896 = vmatpush1.bf16.msra.mxu0 0
    %897 = vmatprep.subr.bf16.mxu0 0
    %898 = vmatpush1.bf16.msra.mxu0 0
    %899 = vmatprep.subr.bf16.mxu0 0
    %900 = vmatpush1.bf16.msra.mxu0 0
    %901 = vmatprep.subr.bf16.mxu0 0
    %902 = vmatpush1.bf16.msra.mxu0 0
    %903 = vmatprep.mubr.bf16.mxu0 0
    %904 = vmatmul.mubr.bf16.gmra.mrb[0].mxu0 %v866
    %v905 = vpop.f32.mrb[0].mxu0
    %v906 = vadd.f32 0.0, %v905
    %v907 = vpop.f32.mrb[0].mxu0
    %v908 = vpop.f32.mrb[0].mxu0
    %v909 = vpop.f32.mrb[0].mxu0
    %910 = vdwg.mxu0
    %911 = vrot.lane.b32.xlu0 %v170, 56
    %v912 = vpop.permute.xlu0 %911
    %v914 = vsel %vm176, %v860, 0
    %v917 = vsel %vm423, %v912, 0
    %919 = vmatprep.subr.bf16.mxu0 0
    %920 = vmatpush1.bf16.msra.mxu0 %v917
    %921 = vmatprep.subr.bf16.mxu0 0
    %922 = vmatpush1.bf16.msra.mxu0 0
    %923 = vmatprep.subr.bf16.mxu0 0
    %924 = vmatpush1.bf16.msra.mxu0 0
    %925 = vmatprep.subr.bf16.mxu0 0
    %926 = vmatpush1.bf16.msra.mxu0 0
    %927 = vmatprep.subr.bf16.mxu0 0
    %928 = vmatpush1.bf16.msra.mxu0 0
    %929 = vmatprep.subr.bf16.mxu0 0
    %930 = vmatpush1.bf16.msra.mxu0 0
    %931 = vmatprep.subr.bf16.mxu0 0
    %932 = vmatpush1.bf16.msra.mxu0 0
    %933 = vmatprep.subr.bf16.mxu0 0
    %934 = vmatpush1.bf16.msra.mxu0 0
    %935 = vmatprep.subr.bf16.mxu0 0
    %936 = vmatpush1.bf16.msra.mxu0 0
    %937 = vmatprep.subr.bf16.mxu0 0
    %938 = vmatpush1.bf16.msra.mxu0 0
    %939 = vmatprep.subr.bf16.mxu0 0
    %940 = vmatpush1.bf16.msra.mxu0 0
    %941 = vmatprep.subr.bf16.mxu0 0
    %942 = vmatpush1.bf16.msra.mxu0 0
    %943 = vmatprep.subr.bf16.mxu0 0
    %944 = vmatpush1.bf16.msra.mxu0 0
    %945 = vmatprep.subr.bf16.mxu0 0
    %946 = vmatpush1.bf16.msra.mxu0 0
    %947 = vmatprep.subr.bf16.mxu0 0
    %948 = vmatpush1.bf16.msra.mxu0 0
    %949 = vmatprep.subr.bf16.mxu0 0
    %950 = vmatpush1.bf16.msra.mxu0 0
    %951 = vmatprep.mubr.bf16.mxu0 0
    %952 = vmatmul.mubr.bf16.gmra.mrb[0].mxu0 %v914
    %v953 = vpop.f32.mrb[0].mxu0
    %v954 = vadd.f32 0.0, %v953
    %v955 = vpop.f32.mrb[0].mxu0
    %v956 = vpop.f32.mrb[0].mxu0
    %v957 = vpop.f32.mrb[0].mxu0
    %958 = vdwg.mxu0
    %959 = vrot.lane.b32.xlu0 %v171, 56
    %v960 = vpop.permute.xlu0 %959
    %v962 = vsel %vm176, %v861, 0
    %v965 = vsel %vm423, %v960, 0
    %967 = vmatprep.subr.bf16.mxu0 0
    %968 = vmatpush1.bf16.msra.mxu0 %v965
    %969 = vmatprep.subr.bf16.mxu0 0
    %970 = vmatpush1.bf16.msra.mxu0 0
    %971 = vmatprep.subr.bf16.mxu0 0
    %972 = vmatpush1.bf16.msra.mxu0 0
    %973 = vmatprep.subr.bf16.mxu0 0
    %974 = vmatpush1.bf16.msra.mxu0 0
    %975 = vmatprep.subr.bf16.mxu0 0
    %976 = vmatpush1.bf16.msra.mxu0 0
    %977 = vmatprep.subr.bf16.mxu0 0
    %978 = vmatpush1.bf16.msra.mxu0 0
    %979 = vmatprep.subr.bf16.mxu0 0
    %980 = vmatpush1.bf16.msra.mxu0 0
    %981 = vmatprep.subr.bf16.mxu0 0
    %982 = vmatpush1.bf16.msra.mxu0 0
    %983 = vmatprep.subr.bf16.mxu0 0
    %984 = vmatpush1.bf16.msra.mxu0 0
    %985 = vmatprep.subr.bf16.mxu0 0
    %986 = vmatpush1.bf16.msra.mxu0 0
    %987 = vmatprep.subr.bf16.mxu0 0
    %988 = vmatpush1.bf16.msra.mxu0 0
    %989 = vmatprep.subr.bf16.mxu0 0
    %990 = vmatpush1.bf16.msra.mxu0 0
    %991 = vmatprep.subr.bf16.mxu0 0
    %992 = vmatpush1.bf16.msra.mxu0 0
    %993 = vmatprep.subr.bf16.mxu0 0
    %994 = vmatpush1.bf16.msra.mxu0 0
    %995 = vmatprep.subr.bf16.mxu0 0
    %996 = vmatpush1.bf16.msra.mxu0 0
    %997 = vmatprep.subr.bf16.mxu0 0
    %998 = vmatpush1.bf16.msra.mxu0 0
    %999 = vmatprep.mubr.bf16.mxu0 0
    %1000 = vmatmul.mubr.bf16.gmra.mrb[0].mxu0 %v962
    %v1001 = vpop.f32.mrb[0].mxu0
    %v1002 = vadd.f32 0.0, %v1001
    %v1003 = vpop.f32.mrb[0].mxu0
    %v1004 = vpop.f32.mrb[0].mxu0
    %v1005 = vpop.f32.mrb[0].mxu0
    %1006 = vdwg.mxu0
    %1007 = vrot.lane.b32.xlu0 %v172, 56
    %v1008 = vpop.permute.xlu0 %1007
    %v1010 = vsel %vm176, %v862, 0
    %v1013 = vsel %vm423, %v1008, 0
    %1015 = vmatprep.subr.bf16.mxu0 0
    %1016 = vmatpush1.bf16.msra.mxu0 %v1013
    %1017 = vmatprep.subr.bf16.mxu0 0
    %1018 = vmatpush1.bf16.msra.mxu0 0
    %1019 = vmatprep.subr.bf16.mxu0 0
    %1020 = vmatpush1.bf16.msra.mxu0 0
    %1021 = vmatprep.subr.bf16.mxu0 0
    %1022 = vmatpush1.bf16.msra.mxu0 0
    %1023 = vmatprep.subr.bf16.mxu0 0
    %1024 = vmatpush1.bf16.msra.mxu0 0
    %1025 = vmatprep.subr.bf16.mxu0 0
    %1026 = vmatpush1.bf16.msra.mxu0 0
    %1027 = vmatprep.subr.bf16.mxu0 0
    %1028 = vmatpush1.bf16.msra.mxu0 0
    %1029 = vmatprep.subr.bf16.mxu0 0
    %1030 = vmatpush1.bf16.msra.mxu0 0
    %1031 = vmatprep.subr.bf16.mxu0 0
    %1032 = vmatpush1.bf16.msra.mxu0 0
    %1033 = vmatprep.subr.bf16.mxu0 0
    %1034 = vmatpush1.bf16.msra.mxu0 0
    %1035 = vmatprep.subr.bf16.mxu0 0
    %1036 = vmatpush1.bf16.msra.mxu0 0
    %1037 = vmatprep.subr.bf16.mxu0 0
    %1038 = vmatpush1.bf16.msra.mxu0 0
    %1039 = vmatprep.subr.bf16.mxu0 0
    %1040 = vmatpush1.bf16.msra.mxu0 0
    %1041 = vmatprep.subr.bf16.mxu0 0
    %1042 = vmatpush1.bf16.msra.mxu0 0
    %1043 = vmatprep.subr.bf16.mxu0 0
    %1044 = vmatpush1.bf16.msra.mxu0 0
    %1045 = vmatprep.subr.bf16.mxu0 0
    %1046 = vmatpush1.bf16.msra.mxu0 0
    %1047 = vmatprep.mubr.bf16.mxu0 0
    %1048 = vmatmul.mubr.bf16.gmra.mrb[0].mxu0 %v1010
    %v1049 = vpop.f32.mrb[0].mxu0
    %v1050 = vadd.f32 0.0, %v1049
    %v1051 = vpop.f32.mrb[0].mxu0
    %v1052 = vpop.f32.mrb[0].mxu0
    %v1053 = vpop.f32.mrb[0].mxu0
    %1054 = vdwg.mxu0
    %1059 = vrot.lane.b32.xlu0 %v906, 8
    %v1060 = vpop.permute.xlu0 %1059
    %1061 = vrot.lane.b32.xlu0 %v954, 8
    %v1062 = vpop.permute.xlu0 %1061
    %1063 = vrot.lane.b32.xlu0 %v1002, 8
    %v1064 = vpop.permute.xlu0 %1063
    %1065 = vrot.lane.b32.xlu0 %v1050, 8
    %v1066 = vpop.permute.xlu0 %1065
    %vm1071 = vcmask 130112
    %1072 = vst.msk [vmem:[#allocation2] sm:$0xff] %vm1071, %v1060
    %1073 = vst.msk [vmem:[#allocation2 + $0x8] sm:$0xff] %vm1071, %v1062
    %1074 = vst.msk [vmem:[#allocation2 + $0x10] sm:$0xff] %vm1071, %v1064
    %1075 = vst.msk [vmem:[#allocation2 + $0x18] sm:$0xff] %vm1071, %v1066
    %1076 = vrot.lane.b32.xlu0 %v169, 112
    %v1077 = vpop.permute.xlu0 %1076
    %1078 = vrot.lane.b32.xlu0 %v169, 80
    %v1079 = vpop.permute.xlu0 %1078
    %v1081 = vsel %vm176, %v1077, 0
    %v1084 = vsel %vm176, %v1079, 0
    %1086 = vmatprep.subr.bf16.mxu0 0
    %1087 = vmatpush1.bf16.xpose.msra.mxu0 %v1084
    %1088 = vmatprep.subr.bf16.mxu0 0
    %1089 = vmatpush1.bf16.xpose.msra.mxu0 0
    %1090 = vmatprep.subr.bf16.mxu0 0
    %1091 = vmatpush1.bf16.xpose.msra.mxu0 0
    %1092 = vmatprep.subr.bf16.mxu0 0
    %1093 = vmatpush1.bf16.xpose.msra.mxu0 0
    %1094 = vmatprep.subr.bf16.mxu0 0
    %1095 = vmatpush1.bf16.xpose.msra.mxu0 0
    %1096 = vmatprep.subr.bf16.mxu0 0
    %1097 = vmatpush1.bf16.xpose.msra.mxu0 0
    %1098 = vmatprep.subr.bf16.mxu0 0
    %1099 = vmatpush1.bf16.xpose.msra.mxu0 0
    %1100 = vmatprep.subr.bf16.mxu0 0
    %1101 = vmatpush1.bf16.xpose.msra.mxu0 0
    %1102 = vmatprep.subr.bf16.mxu0 0
    %1103 = vmatpush1.bf16.xpose.msra.mxu0 0
    %1104 = vmatprep.subr.bf16.mxu0 0
    %1105 = vmatpush1.bf16.xpose.msra.mxu0 0
    %1106 = vmatprep.subr.bf16.mxu0 0
    %1107 = vmatpush1.bf16.xpose.msra.mxu0 0
    %1108 = vmatprep.subr.bf16.mxu0 0
    %1109 = vmatpush1.bf16.xpose.msra.mxu0 0
    %1110 = vmatprep.subr.bf16.mxu0 0
    %1111 = vmatpush1.bf16.xpose.msra.mxu0 0
    %1112 = vmatprep.subr.bf16.mxu0 0
    %1113 = vmatpush1.bf16.xpose.msra.mxu0 0
    %1114 = vmatprep.subr.bf16.mxu0 0
    %1115 = vmatpush1.bf16.xpose.msra.mxu0 0
    %1116 = vmatprep.subr.bf16.mxu0 0
    %1117 = vmatpush1.bf16.xpose.msra.mxu0 0
    %1118 = vmatprep.mubr.bf16.mxu0 0
    %1119 = vmatmul.mubr.bf16.gmra.mrb[0].mxu0 %v1081
    %v1120 = vpop.f32.mrb[0].mxu0
    %v1121 = vadd.f32 %v165, %v1120
    %v1122 = vpop.f32.mrb[0].mxu0
    %v1123 = vpop.f32.mrb[0].mxu0
    %v1124 = vpop.f32.mrb[0].mxu0
    %1125 = vdwg.mxu0
    %1126 = vrot.lane.b32.xlu0 %v170, 112
    %v1127 = vpop.permute.xlu0 %1126
    %1128 = vrot.lane.b32.xlu0 %v170, 80
    %v1129 = vpop.permute.xlu0 %1128
    %v1131 = vsel %vm176, %v1127, 0
    %v1134 = vsel %vm176, %v1129, 0
    %1136 = vmatprep.subr.bf16.mxu0 0
    %1137 = vmatpush1.bf16.xpose.msra.mxu0 %v1134
    %1138 = vmatprep.subr.bf16.mxu0 0
    %1139 = vmatpush1.bf16.xpose.msra.mxu0 0
    %1140 = vmatprep.subr.bf16.mxu0 0
    %1141 = vmatpush1.bf16.xpose.msra.mxu0 0
    %1142 = vmatprep.subr.bf16.mxu0 0
    %1143 = vmatpush1.bf16.xpose.msra.mxu0 0
    %1144 = vmatprep.subr.bf16.mxu0 0
    %1145 = vmatpush1.bf16.xpose.msra.mxu0 0
    %1146 = vmatprep.subr.bf16.mxu0 0
    %1147 = vmatpush1.bf16.xpose.msra.mxu0 0
    %1148 = vmatprep.subr.bf16.mxu0 0
    %1149 = vmatpush1.bf16.xpose.msra.mxu0 0
    %1150 = vmatprep.subr.bf16.mxu0 0
    %1151 = vmatpush1.bf16.xpose.msra.mxu0 0
    %1152 = vmatprep.subr.bf16.mxu0 0
    %1153 = vmatpush1.bf16.xpose.msra.mxu0 0
    %1154 = vmatprep.subr.bf16.mxu0 0
    %1155 = vmatpush1.bf16.xpose.msra.mxu0 0
    %1156 = vmatprep.subr.bf16.mxu0 0
    %1157 = vmatpush1.bf16.xpose.msra.mxu0 0
    %1158 = vmatprep.subr.bf16.mxu0 0
    %1159 = vmatpush1.bf16.xpose.msra.mxu0 0
    %1160 = vmatprep.subr.bf16.mxu0 0
    %1161 = vmatpush1.bf16.xpose.msra.mxu0 0
    %1162 = vmatprep.subr.bf16.mxu0 0
    %1163 = vmatpush1.bf16.xpose.msra.mxu0 0
    %1164 = vmatprep.subr.bf16.mxu0 0
    %1165 = vmatpush1.bf16.xpose.msra.mxu0 0
    %1166 = vmatprep.subr.bf16.mxu0 0
    %1167 = vmatpush1.bf16.xpose.msra.mxu0 0
    %1168 = vmatprep.mubr.bf16.mxu0 0
    %1169 = vmatmul.mubr.bf16.gmra.mrb[0].mxu0 %v1131
    %v1170 = vpop.f32.mrb[0].mxu0
    %v1171 = vadd.f32 %v166, %v1170
    %v1172 = vpop.f32.mrb[0].mxu0
    %v1173 = vpop.f32.mrb[0].mxu0
    %v1174 = vpop.f32.mrb[0].mxu0
    %1175 = vdwg.mxu0
    %1176 = vrot.lane.b32.xlu0 %v171, 112
    %v1177 = vpop.permute.xlu0 %1176
    %1178 = vrot.lane.b32.xlu0 %v171, 80
    %v1179 = vpop.permute.xlu0 %1178
    %v1181 = vsel %vm176, %v1177, 0
    %v1184 = vsel %vm176, %v1179, 0
    %1186 = vmatprep.subr.bf16.mxu0 0
    %1187 = vmatpush1.bf16.xpose.msra.mxu0 %v1184
    %1188 = vmatprep.subr.bf16.mxu0 0
    %1189 = vmatpush1.bf16.xpose.msra.mxu0 0
    %1190 = vmatprep.subr.bf16.mxu0 0
    %1191 = vmatpush1.bf16.xpose.msra.mxu0 0
    %1192 = vmatprep.subr.bf16.mxu0 0
    %1193 = vmatpush1.bf16.xpose.msra.mxu0 0
    %1194 = vmatprep.subr.bf16.mxu0 0
    %1195 = vmatpush1.bf16.xpose.msra.mxu0 0
    %1196 = vmatprep.subr.bf16.mxu0 0
    %1197 = vmatpush1.bf16.xpose.msra.mxu0 0
    %1198 = vmatprep.subr.bf16.mxu0 0
    %1199 = vmatpush1.bf16.xpose.msra.mxu0 0
    %1200 = vmatprep.subr.bf16.mxu0 0
    %1201 = vmatpush1.bf16.xpose.msra.mxu0 0
    %1202 = vmatprep.subr.bf16.mxu0 0
    %1203 = vmatpush1.bf16.xpose.msra.mxu0 0
    %1204 = vmatprep.subr.bf16.mxu0 0
    %1205 = vmatpush1.bf16.xpose.msra.mxu0 0
    %1206 = vmatprep.subr.bf16.mxu0 0
    %1207 = vmatpush1.bf16.xpose.msra.mxu0 0
    %1208 = vmatprep.subr.bf16.mxu0 0
    %1209 = vmatpush1.bf16.xpose.msra.mxu0 0
    %1210 = vmatprep.subr.bf16.mxu0 0
    %1211 = vmatpush1.bf16.xpose.msra.mxu0 0
    %1212 = vmatprep.subr.bf16.mxu0 0
    %1213 = vmatpush1.bf16.xpose.msra.mxu0 0
    %1214 = vmatprep.subr.bf16.mxu0 0
    %1215 = vmatpush1.bf16.xpose.msra.mxu0 0
    %1216 = vmatprep.subr.bf16.mxu0 0
    %1217 = vmatpush1.bf16.xpose.msra.mxu0 0
    %1218 = vmatprep.mubr.bf16.mxu0 0
    %1219 = vmatmul.mubr.bf16.gmra.mrb[0].mxu0 %v1181
    %v1220 = vpop.f32.mrb[0].mxu0
    %v1221 = vadd.f32 %v167, %v1220
    %v1222 = vpop.f32.mrb[0].mxu0
    %v1223 = vpop.f32.mrb[0].mxu0
    %v1224 = vpop.f32.mrb[0].mxu0
    %1225 = vdwg.mxu0
    %1226 = vrot.lane.b32.xlu0 %v172, 112
    %v1227 = vpop.permute.xlu0 %1226
    %1228 = vrot.lane.b32.xlu0 %v172, 80
    %v1229 = vpop.permute.xlu0 %1228
    %v1231 = vsel %vm176, %v1227, 0
    %v1234 = vsel %vm176, %v1229, 0
    %1236 = vmatprep.subr.bf16.mxu0 0
    %1237 = vmatpush1.bf16.xpose.msra.mxu0 %v1234
    %1238 = vmatprep.subr.bf16.mxu0 0
    %1239 = vmatpush1.bf16.xpose.msra.mxu0 0
    %1240 = vmatprep.subr.bf16.mxu0 0
    %1241 = vmatpush1.bf16.xpose.msra.mxu0 0
    %1242 = vmatprep.subr.bf16.mxu0 0
    %1243 = vmatpush1.bf16.xpose.msra.mxu0 0
    %1244 = vmatprep.subr.bf16.mxu0 0
    %1245 = vmatpush1.bf16.xpose.msra.mxu0 0
    %1246 = vmatprep.subr.bf16.mxu0 0
    %1247 = vmatpush1.bf16.xpose.msra.mxu0 0
    %1248 = vmatprep.subr.bf16.mxu0 0
    %1249 = vmatpush1.bf16.xpose.msra.mxu0 0
    %1250 = vmatprep.subr.bf16.mxu0 0
    %1251 = vmatpush1.bf16.xpose.msra.mxu0 0
    %1252 = vmatprep.subr.bf16.mxu0 0
    %1253 = vmatpush1.bf16.xpose.msra.mxu0 0
    %1254 = vmatprep.subr.bf16.mxu0 0
    %1255 = vmatpush1.bf16.xpose.msra.mxu0 0
    %1256 = vmatprep.subr.bf16.mxu0 0
    %1257 = vmatpush1.bf16.xpose.msra.mxu0 0
    %1258 = vmatprep.subr.bf16.mxu0 0
    %1259 = vmatpush1.bf16.xpose.msra.mxu0 0
    %1260 = vmatprep.subr.bf16.mxu0 0
    %1261 = vmatpush1.bf16.xpose.msra.mxu0 0
    %1262 = vmatprep.subr.bf16.mxu0 0
    %1263 = vmatpush1.bf16.xpose.msra.mxu0 0
    %1264 = vmatprep.subr.bf16.mxu0 0
    %1265 = vmatpush1.bf16.xpose.msra.mxu0 0
    %1266 = vmatprep.subr.bf16.mxu0 0
    %1267 = vmatpush1.bf16.xpose.msra.mxu0 0
    %1268 = vmatprep.mubr.bf16.mxu0 0
    %1269 = vmatmul.mubr.bf16.gmra.mrb[0].mxu0 %v1231
    %v1270 = vpop.f32.mrb[0].mxu0
    %v1271 = vadd.f32 %v168, %v1270
    %v1272 = vpop.f32.mrb[0].mxu0
    %v1273 = vpop.f32.mrb[0].mxu0
    %v1274 = vpop.f32.mrb[0].mxu0
    %1275 = vdwg.mxu0
    %v1276 = vsel %vm176, %v1121, -inf
    %1277 = vmax.xlane.f32.xlu0 %v1276
    %v1278 = vpop.xlane.xlu0 %1277
    %v1279 = vsel %vm176, %v1171, -inf
    %1280 = vmax.xlane.f32.xlu0 %v1279
    %v1281 = vpop.xlane.xlu0 %1280
    %v1282 = vsel %vm176, %v1221, -inf
    %1283 = vmax.xlane.f32.xlu0 %v1282
    %v1284 = vpop.xlane.xlu0 %1283
    %v1285 = vsel %vm176, %v1271, -inf
    %1286 = vmax.xlane.f32.xlu0 %v1285
    %v1287 = vpop.xlane.xlu0 %1286
    %v1288 = vsub.f32 %v1121, %v1278
    %v1289 = vsub.f32 %v1171, %v1281
    %v1290 = vsub.f32 %v1221, %v1284
    %v1291 = vsub.f32 %v1271, %v1287
    %v1292 = vmul.f32 %v1288, 1.442695
    %v1293 = vpow.pop %v1292
    %v1294 = vmul.f32 %v1289, 1.442695
    %v1295 = vpow.pop %v1294
    %v1296 = vmul.f32 %v1290, 1.442695
    %v1297 = vpow.pop %v1296
    %v1298 = vmul.f32 %v1291, 1.442695
    %v1299 = vpow.pop %v1298
    %v1300 = vsel %vm176, %v1293, 0.0
    %1301 = vadd.xlane.f32.xlu0 %v1300
    %v1302 = vpop.xlane.xlu0 %1301
    %v1303 = vsel %vm176, %v1295, 0.0
    %1304 = vadd.xlane.f32.xlu0 %v1303
    %v1305 = vpop.xlane.xlu0 %1304
    %v1306 = vsel %vm176, %v1297, 0.0
    %1307 = vadd.xlane.f32.xlu0 %v1306
    %v1308 = vpop.xlane.xlu0 %1307
    %v1309 = vsel %vm176, %v1299, 0.0
    %1310 = vadd.xlane.f32.xlu0 %v1309
    %v1311 = vpop.xlane.xlu0 %1310
    %v1312 = vrcp.pop %v1302
    %v1313 = vrcp.pop %v1305
    %v1314 = vrcp.pop %v1308
    %v1315 = vrcp.pop %v1311
    %v1316 = vmul.f32 %v1293, %v1312
    %v1317 = vmul.f32 %v1295, %v1313
    %v1318 = vmul.f32 %v1297, %v1314
    %v1319 = vmul.f32 %v1299, %v1315
    %v1320 = vpack.c.bf16 %v1316, %v1316
    %v1321 = vpack.c.bf16 %v1317, %v1317
    %v1322 = vpack.c.bf16 %v1318, %v1318
    %v1323 = vpack.c.bf16 %v1319, %v1319
    %1324 = vrot.lane.b32.xlu0 %v169, 48
    %v1325 = vpop.permute.xlu0 %1324
    %v1327 = vsel %vm176, %v1320, 0
    %v1330 = vsel %vm423, %v1325, 0
    %1332 = vmatprep.subr.bf16.mxu0 0
    %1333 = vmatpush1.bf16.msra.mxu0 %v1330
    %1334 = vmatprep.subr.bf16.mxu0 0
    %1335 = vmatpush1.bf16.msra.mxu0 0
    %1336 = vmatprep.subr.bf16.mxu0 0
    %1337 = vmatpush1.bf16.msra.mxu0 0
    %1338 = vmatprep.subr.bf16.mxu0 0
    %1339 = vmatpush1.bf16.msra.mxu0 0
    %1340 = vmatprep.subr.bf16.mxu0 0
    %1341 = vmatpush1.bf16.msra.mxu0 0
    %1342 = vmatprep.subr.bf16.mxu0 0
    %1343 = vmatpush1.bf16.msra.mxu0 0
    %1344 = vmatprep.subr.bf16.mxu0 0
    %1345 = vmatpush1.bf16.msra.mxu0 0
    %1346 = vmatprep.subr.bf16.mxu0 0
    %1347 = vmatpush1.bf16.msra.mxu0 0
    %1348 = vmatprep.subr.bf16.mxu0 0
    %1349 = vmatpush1.bf16.msra.mxu0 0
    %1350 = vmatprep.subr.bf16.mxu0 0
    %1351 = vmatpush1.bf16.msra.mxu0 0
    %1352 = vmatprep.subr.bf16.mxu0 0
    %1353 = vmatpush1.bf16.msra.mxu0 0
    %1354 = vmatprep.subr.bf16.mxu0 0
    %1355 = vmatpush1.bf16.msra.mxu0 0
    %1356 = vmatprep.subr.bf16.mxu0 0
    %1357 = vmatpush1.bf16.msra.mxu0 0
    %1358 = vmatprep.subr.bf16.mxu0 0
    %1359 = vmatpush1.bf16.msra.mxu0 0
    %1360 = vmatprep.subr.bf16.mxu0 0
    %1361 = vmatpush1.bf16.msra.mxu0 0
    %1362 = vmatprep.subr.bf16.mxu0 0
    %1363 = vmatpush1.bf16.msra.mxu0 0
    %1364 = vmatprep.mubr.bf16.mxu0 0
    %1365 = vmatmul.mubr.bf16.gmra.mrb[0].mxu0 %v1327
    %v1366 = vpop.f32.mrb[0].mxu0
    %v1367 = vadd.f32 0.0, %v1366
    %v1368 = vpop.f32.mrb[0].mxu0
    %v1369 = vpop.f32.mrb[0].mxu0
    %v1370 = vpop.f32.mrb[0].mxu0
    %1371 = vdwg.mxu0
    %1372 = vrot.lane.b32.xlu0 %v170, 48
    %v1373 = vpop.permute.xlu0 %1372
    %v1375 = vsel %vm176, %v1321, 0
    %v1378 = vsel %vm423, %v1373, 0
    %1380 = vmatprep.subr.bf16.mxu0 0
    %1381 = vmatpush1.bf16.msra.mxu0 %v1378
    %1382 = vmatprep.subr.bf16.mxu0 0
    %1383 = vmatpush1.bf16.msra.mxu0 0
    %1384 = vmatprep.subr.bf16.mxu0 0
    %1385 = vmatpush1.bf16.msra.mxu0 0
    %1386 = vmatprep.subr.bf16.mxu0 0
    %1387 = vmatpush1.bf16.msra.mxu0 0
    %1388 = vmatprep.subr.bf16.mxu0 0
    %1389 = vmatpush1.bf16.msra.mxu0 0
    %1390 = vmatprep.subr.bf16.mxu0 0
    %1391 = vmatpush1.bf16.msra.mxu0 0
    %1392 = vmatprep.subr.bf16.mxu0 0
    %1393 = vmatpush1.bf16.msra.mxu0 0
    %1394 = vmatprep.subr.bf16.mxu0 0
    %1395 = vmatpush1.bf16.msra.mxu0 0
    %1396 = vmatprep.subr.bf16.mxu0 0
    %1397 = vmatpush1.bf16.msra.mxu0 0
    %1398 = vmatprep.subr.bf16.mxu0 0
    %1399 = vmatpush1.bf16.msra.mxu0 0
    %1400 = vmatprep.subr.bf16.mxu0 0
    %1401 = vmatpush1.bf16.msra.mxu0 0
    %1402 = vmatprep.subr.bf16.mxu0 0
    %1403 = vmatpush1.bf16.msra.mxu0 0
    %1404 = vmatprep.subr.bf16.mxu0 0
    %1405 = vmatpush1.bf16.msra.mxu0 0
    %1406 = vmatprep.subr.bf16.mxu0 0
    %1407 = vmatpush1.bf16.msra.mxu0 0
    %1408 = vmatprep.subr.bf16.mxu0 0
    %1409 = vmatpush1.bf16.msra.mxu0 0
    %1410 = vmatprep.subr.bf16.mxu0 0
    %1411 = vmatpush1.bf16.msra.mxu0 0
    %1412 = vmatprep.mubr.bf16.mxu0 0
    %1413 = vmatmul.mubr.bf16.gmra.mrb[0].mxu0 %v1375
    %v1414 = vpop.f32.mrb[0].mxu0
    %v1415 = vadd.f32 0.0, %v1414
    %v1416 = vpop.f32.mrb[0].mxu0
    %v1417 = vpop.f32.mrb[0].mxu0
    %v1418 = vpop.f32.mrb[0].mxu0
    %1419 = vdwg.mxu0
    %1420 = vrot.lane.b32.xlu0 %v171, 48
    %v1421 = vpop.permute.xlu0 %1420
    %v1423 = vsel %vm176, %v1322, 0
    %v1426 = vsel %vm423, %v1421, 0
    %1428 = vmatprep.subr.bf16.mxu0 0
    %1429 = vmatpush1.bf16.msra.mxu0 %v1426
    %1430 = vmatprep.subr.bf16.mxu0 0
    %1431 = vmatpush1.bf16.msra.mxu0 0
    %1432 = vmatprep.subr.bf16.mxu0 0
    %1433 = vmatpush1.bf16.msra.mxu0 0
    %1434 = vmatprep.subr.bf16.mxu0 0
    %1435 = vmatpush1.bf16.msra.mxu0 0
    %1436 = vmatprep.subr.bf16.mxu0 0
    %1437 = vmatpush1.bf16.msra.mxu0 0
    %1438 = vmatprep.subr.bf16.mxu0 0
    %1439 = vmatpush1.bf16.msra.mxu0 0
    %1440 = vmatprep.subr.bf16.mxu0 0
    %1441 = vmatpush1.bf16.msra.mxu0 0
    %1442 = vmatprep.subr.bf16.mxu0 0
    %1443 = vmatpush1.bf16.msra.mxu0 0
    %1444 = vmatprep.subr.bf16.mxu0 0
    %1445 = vmatpush1.bf16.msra.mxu0 0
    %1446 = vmatprep.subr.bf16.mxu0 0
    %1447 = vmatpush1.bf16.msra.mxu0 0
    %1448 = vmatprep.subr.bf16.mxu0 0
    %1449 = vmatpush1.bf16.msra.mxu0 0
    %1450 = vmatprep.subr.bf16.mxu0 0
    %1451 = vmatpush1.bf16.msra.mxu0 0
    %1452 = vmatprep.subr.bf16.mxu0 0
    %1453 = vmatpush1.bf16.msra.mxu0 0
    %1454 = vmatprep.subr.bf16.mxu0 0
    %1455 = vmatpush1.bf16.msra.mxu0 0
    %1456 = vmatprep.subr.bf16.mxu0 0
    %1457 = vmatpush1.bf16.msra.mxu0 0
    %1458 = vmatprep.subr.bf16.mxu0 0
    %1459 = vmatpush1.bf16.msra.mxu0 0
    %1460 = vmatprep.mubr.bf16.mxu0 0
    %1461 = vmatmul.mubr.bf16.gmra.mrb[0].mxu0 %v1423
    %v1462 = vpop.f32.mrb[0].mxu0
    %v1463 = vadd.f32 0.0, %v1462
    %v1464 = vpop.f32.mrb[0].mxu0
    %v1465 = vpop.f32.mrb[0].mxu0
    %v1466 = vpop.f32.mrb[0].mxu0
    %1467 = vdwg.mxu0
    %1468 = vrot.lane.b32.xlu0 %v172, 48
    %v1469 = vpop.permute.xlu0 %1468
    %v1471 = vsel %vm176, %v1323, 0
    %v1474 = vsel %vm423, %v1469, 0
    %1476 = vmatprep.subr.bf16.mxu0 0
    %1477 = vmatpush1.bf16.msra.mxu0 %v1474
    %1478 = vmatprep.subr.bf16.mxu0 0
    %1479 = vmatpush1.bf16.msra.mxu0 0
    %1480 = vmatprep.subr.bf16.mxu0 0
    %1481 = vmatpush1.bf16.msra.mxu0 0
    %1482 = vmatprep.subr.bf16.mxu0 0
    %1483 = vmatpush1.bf16.msra.mxu0 0
    %1484 = vmatprep.subr.bf16.mxu0 0
    %1485 = vmatpush1.bf16.msra.mxu0 0
    %1486 = vmatprep.subr.bf16.mxu0 0
    %1487 = vmatpush1.bf16.msra.mxu0 0
    %1488 = vmatprep.subr.bf16.mxu0 0
    %1489 = vmatpush1.bf16.msra.mxu0 0
    %1490 = vmatprep.subr.bf16.mxu0 0
    %1491 = vmatpush1.bf16.msra.mxu0 0
    %1492 = vmatprep.subr.bf16.mxu0 0
    %1493 = vmatpush1.bf16.msra.mxu0 0
    %1494 = vmatprep.subr.bf16.mxu0 0
    %1495 = vmatpush1.bf16.msra.mxu0 0
    %1496 = vmatprep.subr.bf16.mxu0 0
    %1497 = vmatpush1.bf16.msra.mxu0 0
    %1498 = vmatprep.subr.bf16.mxu0 0
    %1499 = vmatpush1.bf16.msra.mxu0 0
    %1500 = vmatprep.subr.bf16.mxu0 0
    %1501 = vmatpush1.bf16.msra.mxu0 0
    %1502 = vmatprep.subr.bf16.mxu0 0
    %1503 = vmatpush1.bf16.msra.mxu0 0
    %1504 = vmatprep.subr.bf16.mxu0 0
    %1505 = vmatpush1.bf16.msra.mxu0 0
    %1506 = vmatprep.subr.bf16.mxu0 0
    %1507 = vmatpush1.bf16.msra.mxu0 0
    %1508 = vmatprep.mubr.bf16.mxu0 0
    %1509 = vmatmul.mubr.bf16.gmra.mrb[0].mxu0 %v1471
    %v1510 = vpop.f32.mrb[0].mxu0
    %v1511 = vadd.f32 0.0, %v1510
    %v1512 = vpop.f32.mrb[0].mxu0
    %v1513 = vpop.f32.mrb[0].mxu0
    %v1514 = vpop.f32.mrb[0].mxu0
    %1515 = vdwg.mxu0
    %1520 = vrot.lane.b32.xlu0 %v1367, 16
    %v1521 = vpop.permute.xlu0 %1520
    %1522 = vrot.lane.b32.xlu0 %v1415, 16
    %v1523 = vpop.permute.xlu0 %1522
    %1524 = vrot.lane.b32.xlu0 %v1463, 16
    %v1525 = vpop.permute.xlu0 %1524
    %1526 = vrot.lane.b32.xlu0 %v1511, 16
    %v1527 = vpop.permute.xlu0 %1526
    %vm1532 = vcmask 195712
    %1533 = vst.msk [vmem:[#allocation2] sm:$0xff] %vm1532, %v1521
    %1534 = vst.msk [vmem:[#allocation2 + $0x8] sm:$0xff] %vm1532, %v1523
    %1535 = vst.msk [vmem:[#allocation2 + $0x10] sm:$0xff] %vm1532, %v1525
    %1536 = vst.msk [vmem:[#allocation2 + $0x18] sm:$0xff] %vm1532, %v1527
    %1537 = vrot.lane.b32.xlu0 %v169, 104
    %v1538 = vpop.permute.xlu0 %1537
    %1539 = vrot.lane.b32.xlu0 %v169, 72
    %v1540 = vpop.permute.xlu0 %1539
    %v1542 = vsel %vm176, %v1538, 0
    %v1545 = vsel %vm176, %v1540, 0
    %1547 = vmatprep.subr.bf16.mxu0 0
    %1548 = vmatpush1.bf16.xpose.msra.mxu0 %v1545
    %1549 = vmatprep.subr.bf16.mxu0 0
    %1550 = vmatpush1.bf16.xpose.msra.mxu0 0
    %1551 = vmatprep.subr.bf16.mxu0 0
    %1552 = vmatpush1.bf16.xpose.msra.mxu0 0
    %1553 = vmatprep.subr.bf16.mxu0 0
    %1554 = vmatpush1.bf16.xpose.msra.mxu0 0
    %1555 = vmatprep.subr.bf16.mxu0 0
    %1556 = vmatpush1.bf16.xpose.msra.mxu0 0
    %1557 = vmatprep.subr.bf16.mxu0 0
    %1558 = vmatpush1.bf16.xpose.msra.mxu0 0
    %1559 = vmatprep.subr.bf16.mxu0 0
    %1560 = vmatpush1.bf16.xpose.msra.mxu0 0
    %1561 = vmatprep.subr.bf16.mxu0 0
    %1562 = vmatpush1.bf16.xpose.msra.mxu0 0
    %1563 = vmatprep.subr.bf16.mxu0 0
    %1564 = vmatpush1.bf16.xpose.msra.mxu0 0
    %1565 = vmatprep.subr.bf16.mxu0 0
    %1566 = vmatpush1.bf16.xpose.msra.mxu0 0
    %1567 = vmatprep.subr.bf16.mxu0 0
    %1568 = vmatpush1.bf16.xpose.msra.mxu0 0
    %1569 = vmatprep.subr.bf16.mxu0 0
    %1570 = vmatpush1.bf16.xpose.msra.mxu0 0
    %1571 = vmatprep.subr.bf16.mxu0 0
    %1572 = vmatpush1.bf16.xpose.msra.mxu0 0
    %1573 = vmatprep.subr.bf16.mxu0 0
    %1574 = vmatpush1.bf16.xpose.msra.mxu0 0
    %1575 = vmatprep.subr.bf16.mxu0 0
    %1576 = vmatpush1.bf16.xpose.msra.mxu0 0
    %1577 = vmatprep.subr.bf16.mxu0 0
    %1578 = vmatpush1.bf16.xpose.msra.mxu0 0
    %1579 = vmatprep.mubr.bf16.mxu0 0
    %1580 = vmatmul.mubr.bf16.gmra.mrb[0].mxu0 %v1542
    %v1581 = vpop.f32.mrb[0].mxu0
    %v1582 = vadd.f32 %v165, %v1581
    %v1583 = vpop.f32.mrb[0].mxu0
    %v1584 = vpop.f32.mrb[0].mxu0
    %v1585 = vpop.f32.mrb[0].mxu0
    %1586 = vdwg.mxu0
    %1587 = vrot.lane.b32.xlu0 %v170, 104
    %v1588 = vpop.permute.xlu0 %1587
    %1589 = vrot.lane.b32.xlu0 %v170, 72
    %v1590 = vpop.permute.xlu0 %1589
    %v1592 = vsel %vm176, %v1588, 0
    %v1595 = vsel %vm176, %v1590, 0
    %1597 = vmatprep.subr.bf16.mxu0 0
    %1598 = vmatpush1.bf16.xpose.msra.mxu0 %v1595
    %1599 = vmatprep.subr.bf16.mxu0 0
    %1600 = vmatpush1.bf16.xpose.msra.mxu0 0
    %1601 = vmatprep.subr.bf16.mxu0 0
    %1602 = vmatpush1.bf16.xpose.msra.mxu0 0
    %1603 = vmatprep.subr.bf16.mxu0 0
    %1604 = vmatpush1.bf16.xpose.msra.mxu0 0
    %1605 = vmatprep.subr.bf16.mxu0 0
    %1606 = vmatpush1.bf16.xpose.msra.mxu0 0
    %1607 = vmatprep.subr.bf16.mxu0 0
    %1608 = vmatpush1.bf16.xpose.msra.mxu0 0
    %1609 = vmatprep.subr.bf16.mxu0 0
    %1610 = vmatpush1.bf16.xpose.msra.mxu0 0
    %1611 = vmatprep.subr.bf16.mxu0 0
    %1612 = vmatpush1.bf16.xpose.msra.mxu0 0
    %1613 = vmatprep.subr.bf16.mxu0 0
    %1614 = vmatpush1.bf16.xpose.msra.mxu0 0
    %1615 = vmatprep.subr.bf16.mxu0 0
    %1616 = vmatpush1.bf16.xpose.msra.mxu0 0
    %1617 = vmatprep.subr.bf16.mxu0 0
    %1618 = vmatpush1.bf16.xpose.msra.mxu0 0
    %1619 = vmatprep.subr.bf16.mxu0 0
    %1620 = vmatpush1.bf16.xpose.msra.mxu0 0
    %1621 = vmatprep.subr.bf16.mxu0 0
    %1622 = vmatpush1.bf16.xpose.msra.mxu0 0
    %1623 = vmatprep.subr.bf16.mxu0 0
    %1624 = vmatpush1.bf16.xpose.msra.mxu0 0
    %1625 = vmatprep.subr.bf16.mxu0 0
    %1626 = vmatpush1.bf16.xpose.msra.mxu0 0
    %1627 = vmatprep.subr.bf16.mxu0 0
    %1628 = vmatpush1.bf16.xpose.msra.mxu0 0
    %1629 = vmatprep.mubr.bf16.mxu0 0
    %1630 = vmatmul.mubr.bf16.gmra.mrb[0].mxu0 %v1592
    %v1631 = vpop.f32.mrb[0].mxu0
    %v1632 = vadd.f32 %v166, %v1631
    %v1633 = vpop.f32.mrb[0].mxu0
    %v1634 = vpop.f32.mrb[0].mxu0
    %v1635 = vpop.f32.mrb[0].mxu0
    %1636 = vdwg.mxu0
    %1637 = vrot.lane.b32.xlu0 %v171, 104
    %v1638 = vpop.permute.xlu0 %1637
    %1639 = vrot.lane.b32.xlu0 %v171, 72
    %v1640 = vpop.permute.xlu0 %1639
    %v1642 = vsel %vm176, %v1638, 0
    %v1645 = vsel %vm176, %v1640, 0
    %1647 = vmatprep.subr.bf16.mxu0 0
    %1648 = vmatpush1.bf16.xpose.msra.mxu0 %v1645
    %1649 = vmatprep.subr.bf16.mxu0 0
    %1650 = vmatpush1.bf16.xpose.msra.mxu0 0
    %1651 = vmatprep.subr.bf16.mxu0 0
    %1652 = vmatpush1.bf16.xpose.msra.mxu0 0
    %1653 = vmatprep.subr.bf16.mxu0 0
    %1654 = vmatpush1.bf16.xpose.msra.mxu0 0
    %1655 = vmatprep.subr.bf16.mxu0 0
    %1656 = vmatpush1.bf16.xpose.msra.mxu0 0
    %1657 = vmatprep.subr.bf16.mxu0 0
    %1658 = vmatpush1.bf16.xpose.msra.mxu0 0
    %1659 = vmatprep.subr.bf16.mxu0 0
    %1660 = vmatpush1.bf16.xpose.msra.mxu0 0
    %1661 = vmatprep.subr.bf16.mxu0 0
    %1662 = vmatpush1.bf16.xpose.msra.mxu0 0
    %1663 = vmatprep.subr.bf16.mxu0 0
    %1664 = vmatpush1.bf16.xpose.msra.mxu0 0
    %1665 = vmatprep.subr.bf16.mxu0 0
    %1666 = vmatpush1.bf16.xpose.msra.mxu0 0
    %1667 = vmatprep.subr.bf16.mxu0 0
    %1668 = vmatpush1.bf16.xpose.msra.mxu0 0
    %1669 = vmatprep.subr.bf16.mxu0 0
    %1670 = vmatpush1.bf16.xpose.msra.mxu0 0
    %1671 = vmatprep.subr.bf16.mxu0 0
    %1672 = vmatpush1.bf16.xpose.msra.mxu0 0
    %1673 = vmatprep.subr.bf16.mxu0 0
    %1674 = vmatpush1.bf16.xpose.msra.mxu0 0
    %1675 = vmatprep.subr.bf16.mxu0 0
    %1676 = vmatpush1.bf16.xpose.msra.mxu0 0
    %1677 = vmatprep.subr.bf16.mxu0 0
    %1678 = vmatpush1.bf16.xpose.msra.mxu0 0
    %1679 = vmatprep.mubr.bf16.mxu0 0
    %1680 = vmatmul.mubr.bf16.gmra.mrb[0].mxu0 %v1642
    %v1681 = vpop.f32.mrb[0].mxu0
    %v1682 = vadd.f32 %v167, %v1681
    %v1683 = vpop.f32.mrb[0].mxu0
    %v1684 = vpop.f32.mrb[0].mxu0
    %v1685 = vpop.f32.mrb[0].mxu0
    %1686 = vdwg.mxu0
    %1687 = vrot.lane.b32.xlu0 %v172, 104
    %v1688 = vpop.permute.xlu0 %1687
    %1689 = vrot.lane.b32.xlu0 %v172, 72
    %v1690 = vpop.permute.xlu0 %1689
    %v1692 = vsel %vm176, %v1688, 0
    %v1695 = vsel %vm176, %v1690, 0
    %1697 = vmatprep.subr.bf16.mxu0 0
    %1698 = vmatpush1.bf16.xpose.msra.mxu0 %v1695
    %1699 = vmatprep.subr.bf16.mxu0 0
    %1700 = vmatpush1.bf16.xpose.msra.mxu0 0
    %1701 = vmatprep.subr.bf16.mxu0 0
    %1702 = vmatpush1.bf16.xpose.msra.mxu0 0
    %1703 = vmatprep.subr.bf16.mxu0 0
    %1704 = vmatpush1.bf16.xpose.msra.mxu0 0
    %1705 = vmatprep.subr.bf16.mxu0 0
    %1706 = vmatpush1.bf16.xpose.msra.mxu0 0
    %1707 = vmatprep.subr.bf16.mxu0 0
    %1708 = vmatpush1.bf16.xpose.msra.mxu0 0
    %1709 = vmatprep.subr.bf16.mxu0 0
    %1710 = vmatpush1.bf16.xpose.msra.mxu0 0
    %1711 = vmatprep.subr.bf16.mxu0 0
    %1712 = vmatpush1.bf16.xpose.msra.mxu0 0
    %1713 = vmatprep.subr.bf16.mxu0 0
    %1714 = vmatpush1.bf16.xpose.msra.mxu0 0
    %1715 = vmatprep.subr.bf16.mxu0 0
    %1716 = vmatpush1.bf16.xpose.msra.mxu0 0
    %1717 = vmatprep.subr.bf16.mxu0 0
    %1718 = vmatpush1.bf16.xpose.msra.mxu0 0
    %1719 = vmatprep.subr.bf16.mxu0 0
    %1720 = vmatpush1.bf16.xpose.msra.mxu0 0
    %1721 = vmatprep.subr.bf16.mxu0 0
    %1722 = vmatpush1.bf16.xpose.msra.mxu0 0
    %1723 = vmatprep.subr.bf16.mxu0 0
    %1724 = vmatpush1.bf16.xpose.msra.mxu0 0
    %1725 = vmatprep.subr.bf16.mxu0 0
    %1726 = vmatpush1.bf16.xpose.msra.mxu0 0
    %1727 = vmatprep.subr.bf16.mxu0 0
    %1728 = vmatpush1.bf16.xpose.msra.mxu0 0
    %1729 = vmatprep.mubr.bf16.mxu0 0
    %1730 = vmatmul.mubr.bf16.gmra.mrb[0].mxu0 %v1692
    %v1731 = vpop.f32.mrb[0].mxu0
    %v1732 = vadd.f32 %v168, %v1731
    %v1733 = vpop.f32.mrb[0].mxu0
    %v1734 = vpop.f32.mrb[0].mxu0
    %v1735 = vpop.f32.mrb[0].mxu0
    %1736 = vdwg.mxu0
    %v1737 = vsel %vm176, %v1582, -inf
    %1738 = vmax.xlane.f32.xlu0 %v1737
    %v1739 = vpop.xlane.xlu0 %1738
    %v1740 = vsel %vm176, %v1632, -inf
    %1741 = vmax.xlane.f32.xlu0 %v1740
    %v1742 = vpop.xlane.xlu0 %1741
    %v1743 = vsel %vm176, %v1682, -inf
    %1744 = vmax.xlane.f32.xlu0 %v1743
    %v1745 = vpop.xlane.xlu0 %1744
    %v1746 = vsel %vm176, %v1732, -inf
    %1747 = vmax.xlane.f32.xlu0 %v1746
    %v1748 = vpop.xlane.xlu0 %1747
    %v1749 = vsub.f32 %v1582, %v1739
    %v1750 = vsub.f32 %v1632, %v1742
    %v1751 = vsub.f32 %v1682, %v1745
    %v1752 = vsub.f32 %v1732, %v1748
    %v1753 = vmul.f32 %v1749, 1.442695
    %v1754 = vpow.pop %v1753
    %v1755 = vmul.f32 %v1750, 1.442695
    %v1756 = vpow.pop %v1755
    %v1757 = vmul.f32 %v1751, 1.442695
    %v1758 = vpow.pop %v1757
    %v1759 = vmul.f32 %v1752, 1.442695
    %v1760 = vpow.pop %v1759
    %v1761 = vsel %vm176, %v1754, 0.0
    %1762 = vadd.xlane.f32.xlu0 %v1761
    %v1763 = vpop.xlane.xlu0 %1762
    %v1764 = vsel %vm176, %v1756, 0.0
    %1765 = vadd.xlane.f32.xlu0 %v1764
    %v1766 = vpop.xlane.xlu0 %1765
    %v1767 = vsel %vm176, %v1758, 0.0
    %1768 = vadd.xlane.f32.xlu0 %v1767
    %v1769 = vpop.xlane.xlu0 %1768
    %v1770 = vsel %vm176, %v1760, 0.0
    %1771 = vadd.xlane.f32.xlu0 %v1770
    %v1772 = vpop.xlane.xlu0 %1771
    %v1773 = vrcp.pop %v1763
    %v1774 = vrcp.pop %v1766
    %v1775 = vrcp.pop %v1769
    %v1776 = vrcp.pop %v1772
    %v1777 = vmul.f32 %v1754, %v1773
    %v1778 = vmul.f32 %v1756, %v1774
    %v1779 = vmul.f32 %v1758, %v1775
    %v1780 = vmul.f32 %v1760, %v1776
    %v1781 = vpack.c.bf16 %v1777, %v1777
    %v1782 = vpack.c.bf16 %v1778, %v1778
    %v1783 = vpack.c.bf16 %v1779, %v1779
    %v1784 = vpack.c.bf16 %v1780, %v1780
    %1785 = vrot.lane.b32.xlu0 %v169, 40
    %v1786 = vpop.permute.xlu0 %1785
    %v1788 = vsel %vm176, %v1781, 0
    %v1791 = vsel %vm423, %v1786, 0
    %1793 = vmatprep.subr.bf16.mxu0 0
    %1794 = vmatpush1.bf16.msra.mxu0 %v1791
    %1795 = vmatprep.subr.bf16.mxu0 0
    %1796 = vmatpush1.bf16.msra.mxu0 0
    %1797 = vmatprep.subr.bf16.mxu0 0
    %1798 = vmatpush1.bf16.msra.mxu0 0
    %1799 = vmatprep.subr.bf16.mxu0 0
    %1800 = vmatpush1.bf16.msra.mxu0 0
    %1801 = vmatprep.subr.bf16.mxu0 0
    %1802 = vmatpush1.bf16.msra.mxu0 0
    %1803 = vmatprep.subr.bf16.mxu0 0
    %1804 = vmatpush1.bf16.msra.mxu0 0
    %1805 = vmatprep.subr.bf16.mxu0 0
    %1806 = vmatpush1.bf16.msra.mxu0 0
    %1807 = vmatprep.subr.bf16.mxu0 0
    %1808 = vmatpush1.bf16.msra.mxu0 0
    %1809 = vmatprep.subr.bf16.mxu0 0
    %1810 = vmatpush1.bf16.msra.mxu0 0
    %1811 = vmatprep.subr.bf16.mxu0 0
    %1812 = vmatpush1.bf16.msra.mxu0 0
    %1813 = vmatprep.subr.bf16.mxu0 0
    %1814 = vmatpush1.bf16.msra.mxu0 0
    %1815 = vmatprep.subr.bf16.mxu0 0
    %1816 = vmatpush1.bf16.msra.mxu0 0
    %1817 = vmatprep.subr.bf16.mxu0 0
    %1818 = vmatpush1.bf16.msra.mxu0 0
    %1819 = vmatprep.subr.bf16.mxu0 0
    %1820 = vmatpush1.bf16.msra.mxu0 0
    %1821 = vmatprep.subr.bf16.mxu0 0
    %1822 = vmatpush1.bf16.msra.mxu0 0
    %1823 = vmatprep.subr.bf16.mxu0 0
    %1824 = vmatpush1.bf16.msra.mxu0 0
    %1825 = vmatprep.mubr.bf16.mxu0 0
    %1826 = vmatmul.mubr.bf16.gmra.mrb[0].mxu0 %v1788
    %v1827 = vpop.f32.mrb[0].mxu0
    %v1828 = vadd.f32 0.0, %v1827
    %v1829 = vpop.f32.mrb[0].mxu0
    %v1830 = vpop.f32.mrb[0].mxu0
    %v1831 = vpop.f32.mrb[0].mxu0
    %1832 = vdwg.mxu0
    %1833 = vrot.lane.b32.xlu0 %v170, 40
    %v1834 = vpop.permute.xlu0 %1833
    %v1836 = vsel %vm176, %v1782, 0
    %v1839 = vsel %vm423, %v1834, 0
    %1841 = vmatprep.subr.bf16.mxu0 0
    %1842 = vmatpush1.bf16.msra.mxu0 %v1839
    %1843 = vmatprep.subr.bf16.mxu0 0
    %1844 = vmatpush1.bf16.msra.mxu0 0
    %1845 = vmatprep.subr.bf16.mxu0 0
    %1846 = vmatpush1.bf16.msra.mxu0 0
    %1847 = vmatprep.subr.bf16.mxu0 0
    %1848 = vmatpush1.bf16.msra.mxu0 0
    %1849 = vmatprep.subr.bf16.mxu0 0
    %1850 = vmatpush1.bf16.msra.mxu0 0
    %1851 = vmatprep.subr.bf16.mxu0 0
    %1852 = vmatpush1.bf16.msra.mxu0 0
    %1853 = vmatprep.subr.bf16.mxu0 0
    %1854 = vmatpush1.bf16.msra.mxu0 0
    %1855 = vmatprep.subr.bf16.mxu0 0
    %1856 = vmatpush1.bf16.msra.mxu0 0
    %1857 = vmatprep.subr.bf16.mxu0 0
    %1858 = vmatpush1.bf16.msra.mxu0 0
    %1859 = vmatprep.subr.bf16.mxu0 0
    %1860 = vmatpush1.bf16.msra.mxu0 0
    %1861 = vmatprep.subr.bf16.mxu0 0
    %1862 = vmatpush1.bf16.msra.mxu0 0
    %1863 = vmatprep.subr.bf16.mxu0 0
    %1864 = vmatpush1.bf16.msra.mxu0 0
    %1865 = vmatprep.subr.bf16.mxu0 0
    %1866 = vmatpush1.bf16.msra.mxu0 0
    %1867 = vmatprep.subr.bf16.mxu0 0
    %1868 = vmatpush1.bf16.msra.mxu0 0
    %1869 = vmatprep.subr.bf16.mxu0 0
    %1870 = vmatpush1.bf16.msra.mxu0 0
    %1871 = vmatprep.subr.bf16.mxu0 0
    %1872 = vmatpush1.bf16.msra.mxu0 0
    %1873 = vmatprep.mubr.bf16.mxu0 0
    %1874 = vmatmul.mubr.bf16.gmra.mrb[0].mxu0 %v1836
    %v1875 = vpop.f32.mrb[0].mxu0
    %v1876 = vadd.f32 0.0, %v1875
    %v1877 = vpop.f32.mrb[0].mxu0
    %v1878 = vpop.f32.mrb[0].mxu0
    %v1879 = vpop.f32.mrb[0].mxu0
    %1880 = vdwg.mxu0
    %1881 = vrot.lane.b32.xlu0 %v171, 40
    %v1882 = vpop.permute.xlu0 %1881
    %v1884 = vsel %vm176, %v1783, 0
    %v1887 = vsel %vm423, %v1882, 0
    %1889 = vmatprep.subr.bf16.mxu0 0
    %1890 = vmatpush1.bf16.msra.mxu0 %v1887
    %1891 = vmatprep.subr.bf16.mxu0 0
    %1892 = vmatpush1.bf16.msra.mxu0 0
    %1893 = vmatprep.subr.bf16.mxu0 0
    %1894 = vmatpush1.bf16.msra.mxu0 0
    %1895 = vmatprep.subr.bf16.mxu0 0
    %1896 = vmatpush1.bf16.msra.mxu0 0
    %1897 = vmatprep.subr.bf16.mxu0 0
    %1898 = vmatpush1.bf16.msra.mxu0 0
    %1899 = vmatprep.subr.bf16.mxu0 0
    %1900 = vmatpush1.bf16.msra.mxu0 0
    %1901 = vmatprep.subr.bf16.mxu0 0
    %1902 = vmatpush1.bf16.msra.mxu0 0
    %1903 = vmatprep.subr.bf16.mxu0 0
    %1904 = vmatpush1.bf16.msra.mxu0 0
    %1905 = vmatprep.subr.bf16.mxu0 0
    %1906 = vmatpush1.bf16.msra.mxu0 0
    %1907 = vmatprep.subr.bf16.mxu0 0
    %1908 = vmatpush1.bf16.msra.mxu0 0
    %1909 = vmatprep.subr.bf16.mxu0 0
    %1910 = vmatpush1.bf16.msra.mxu0 0
    %1911 = vmatprep.subr.bf16.mxu0 0
    %1912 = vmatpush1.bf16.msra.mxu0 0
    %1913 = vmatprep.subr.bf16.mxu0 0
    %1914 = vmatpush1.bf16.msra.mxu0 0
    %1915 = vmatprep.subr.bf16.mxu0 0
    %1916 = vmatpush1.bf16.msra.mxu0 0
    %1917 = vmatprep.subr.bf16.mxu0 0
    %1918 = vmatpush1.bf16.msra.mxu0 0
    %1919 = vmatprep.subr.bf16.mxu0 0
    %1920 = vmatpush1.bf16.msra.mxu0 0
    %1921 = vmatprep.mubr.bf16.mxu0 0
    %1922 = vmatmul.mubr.bf16.gmra.mrb[0].mxu0 %v1884
    %v1923 = vpop.f32.mrb[0].mxu0
    %v1924 = vadd.f32 0.0, %v1923
    %v1925 = vpop.f32.mrb[0].mxu0
    %v1926 = vpop.f32.mrb[0].mxu0
    %v1927 = vpop.f32.mrb[0].mxu0
    %1928 = vdwg.mxu0
    %1929 = vrot.lane.b32.xlu0 %v172, 40
    %v1930 = vpop.permute.xlu0 %1929
    %v1932 = vsel %vm176, %v1784, 0
    %v1935 = vsel %vm423, %v1930, 0
    %1937 = vmatprep.subr.bf16.mxu0 0
    %1938 = vmatpush1.bf16.msra.mxu0 %v1935
    %1939 = vmatprep.subr.bf16.mxu0 0
    %1940 = vmatpush1.bf16.msra.mxu0 0
    %1941 = vmatprep.subr.bf16.mxu0 0
    %1942 = vmatpush1.bf16.msra.mxu0 0
    %1943 = vmatprep.subr.bf16.mxu0 0
    %1944 = vmatpush1.bf16.msra.mxu0 0
    %1945 = vmatprep.subr.bf16.mxu0 0
    %1946 = vmatpush1.bf16.msra.mxu0 0
    %1947 = vmatprep.subr.bf16.mxu0 0
    %1948 = vmatpush1.bf16.msra.mxu0 0
    %1949 = vmatprep.subr.bf16.mxu0 0
    %1950 = vmatpush1.bf16.msra.mxu0 0
    %1951 = vmatprep.subr.bf16.mxu0 0
    %1952 = vmatpush1.bf16.msra.mxu0 0
    %1953 = vmatprep.subr.bf16.mxu0 0
    %1954 = vmatpush1.bf16.msra.mxu0 0
    %1955 = vmatprep.subr.bf16.mxu0 0
    %1956 = vmatpush1.bf16.msra.mxu0 0
    %1957 = vmatprep.subr.bf16.mxu0 0
    %1958 = vmatpush1.bf16.msra.mxu0 0
    %1959 = vmatprep.subr.bf16.mxu0 0
    %1960 = vmatpush1.bf16.msra.mxu0 0
    %1961 = vmatprep.subr.bf16.mxu0 0
    %1962 = vmatpush1.bf16.msra.mxu0 0
    %1963 = vmatprep.subr.bf16.mxu0 0
    %1964 = vmatpush1.bf16.msra.mxu0 0
    %1965 = vmatprep.subr.bf16.mxu0 0
    %1966 = vmatpush1.bf16.msra.mxu0 0
    %1967 = vmatprep.subr.bf16.mxu0 0
    %1968 = vmatpush1.bf16.msra.mxu0 0
    %1969 = vmatprep.mubr.bf16.mxu0 0
    %1970 = vmatmul.mubr.bf16.gmra.mrb[0].mxu0 %v1932
    %v1971 = vpop.f32.mrb[0].mxu0
    %v1972 = vadd.f32 0.0, %v1971
    %v1973 = vpop.f32.mrb[0].mxu0
    %v1974 = vpop.f32.mrb[0].mxu0
    %v1975 = vpop.f32.mrb[0].mxu0
    %1976 = vdwg.mxu0
    %1981 = vrot.lane.b32.xlu0 %v1828, 24
    %v1982 = vpop.permute.xlu0 %1981
    %1983 = vrot.lane.b32.xlu0 %v1876, 24
    %v1984 = vpop.permute.xlu0 %1983
    %1985 = vrot.lane.b32.xlu0 %v1924, 24
    %v1986 = vpop.permute.xlu0 %1985
    %1987 = vrot.lane.b32.xlu0 %v1972, 24
    %v1988 = vpop.permute.xlu0 %1987
    %vm1993 = vcmask 261312
    %1994 = vst.msk [vmem:[#allocation2] sm:$0xff] %vm1993, %v1982
    %1995 = vst.msk [vmem:[#allocation2 + $0x8] sm:$0xff] %vm1993, %v1984
    %1996 = vst.msk [vmem:[#allocation2 + $0x10] sm:$0xff] %vm1993, %v1986
    %1997 = vst.msk [vmem:[#allocation2 + $0x18] sm:$0xff] %vm1993, %v1988
    %v1998 = vld [vmem:[#allocation2] sm:$0xff]
    %v1999 = vld [vmem:[#allocation2 + $0x8] sm:$0xff]
    %v2000 = vld [vmem:[#allocation2 + $0x10] sm:$0xff]
    %v2001 = vld [vmem:[#allocation2 + $0x18] sm:$0xff]
    %v2002 = vpack.c.bf16 %v1999, %v1998
    %v2003 = vpack.c.bf16 %v2001, %v2000
    %v2004 = vld [vmem:[#allocation9] sm:$0xf]
    %v2005 = vld [vmem:[#allocation9 + $0x4] sm:$0xf]
    %v2006 = vld [vmem:[#allocation9 + $0x8] sm:$0xf]
    %v2007 = vld [vmem:[#allocation9 + $0xc] sm:$0xf]
    %v2008 = vld [vmem:[%s5] sm:$0x1]
    %v2010 = vlaneseq
    %v2011 = vshrl.u32 %v2010, 7
    %v2012 = vsub.s32 0, %v2011
    %v2013 = vrot.slane %v2008, %v2012
    %v2019 = vunpack.c.l.b16 %v2004
    %v2020 = vunpack.c.l.b16 %v2005
    %v2021 = vunpack.c.l.b16 %v2006
    %v2022 = vunpack.c.l.b16 %v2007
    %v2023 = vpack.c.b16 %v2020, %v2019
    %v2024 = vpack.c.b16 %v2022, %v2021
    %v2028 = vsel %vm109, %v2002, 0
    %v2031 = vsel %vm109, %v2003, 0
    %2033 = vmatprep.subr.bf16.mxu0 0
    %2034 = vmatpush1.bf16.msra.mxu0 %v2023
    %2035 = vmatprep.subr.bf16.mxu0 0
    %2036 = vmatpush1.bf16.msra.mxu0 %v2024
    %2037 = vmatprep.subr.bf16.mxu0 0
    %2038 = vmatpush1.bf16.msra.mxu0 0
    %2039 = vmatprep.subr.bf16.mxu0 0
    %2040 = vmatpush1.bf16.msra.mxu0 0
    %2041 = vmatprep.subr.bf16.mxu0 0
    %2042 = vmatpush1.bf16.msra.mxu0 0
    %2043 = vmatprep.subr.bf16.mxu0 0
    %2044 = vmatpush1.bf16.msra.mxu0 0
    %2045 = vmatprep.subr.bf16.mxu0 0
    %2046 = vmatpush1.bf16.msra.mxu0 0
    %2047 = vmatprep.subr.bf16.mxu0 0
    %2048 = vmatpush1.bf16.msra.mxu0 0
    %2049 = vmatprep.subr.bf16.mxu0 0
    %2050 = vmatpush1.bf16.msra.mxu0 0
    %2051 = vmatprep.subr.bf16.mxu0 0
    %2052 = vmatpush1.bf16.msra.mxu0 0
    %2053 = vmatprep.subr.bf16.mxu0 0
    %2054 = vmatpush1.bf16.msra.mxu0 0
    %2055 = vmatprep.subr.bf16.mxu0 0
    %2056 = vmatpush1.bf16.msra.mxu0 0
    %2057 = vmatprep.subr.bf16.mxu0 0
    %2058 = vmatpush1.bf16.msra.mxu0 0
    %2059 = vmatprep.subr.bf16.mxu0 0
    %2060 = vmatpush1.bf16.msra.mxu0 0
    %2061 = vmatprep.subr.bf16.mxu0 0
    %2062 = vmatpush1.bf16.msra.mxu0 0
    %2063 = vmatprep.subr.bf16.mxu0 0
    %2064 = vmatpush1.bf16.msra.mxu0 0
    %2065 = vmatprep.mubr.bf16.mxu0 0
    %2066 = vmatmul.mubr.bf16.gmra.mrb[0].mxu0 %v2028
    %v2067 = vpop.f32.mrb[0].mxu0
    %v2068 = vadd.f32 %v2013, %v2067
    %v2069 = vpop.f32.mrb[0].mxu0
    %v2070 = vpop.f32.mrb[0].mxu0
    %v2071 = vadd.f32 %v2013, %v2070
    %v2072 = vpop.f32.mrb[0].mxu0
    %2073 = vmatprep.mubr.bf16.mxu0 0
    %2074 = vmatmul.mubr.bf16.gmra.mrb[0].mxu0 %v2031
    %v2075 = vpop.f32.mrb[0].mxu0
    %v2076 = vadd.f32 %v2013, %v2075
    %v2077 = vpop.f32.mrb[0].mxu0
    %v2078 = vpop.f32.mrb[0].mxu0
    %v2079 = vadd.f32 %v2013, %v2078
    %v2080 = vpop.f32.mrb[0].mxu0
    %2081 = vdwg.mxu0
    %2082 = vst.msk [vmem:[#allocation11] sm:$0xff] %vm109, %v2068
    %2083 = vst.msk [vmem:[#allocation11 + $0x8] sm:$0xff] %vm109, %v2071
    %2084 = vst.msk [vmem:[#allocation11 + $0x10] sm:$0xff] %vm109, %v2076
    %2085 = vst.msk [vmem:[#allocation11 + $0x18] sm:$0xff] %vm109, %v2079
    // Predicated region
    $region42: #{tpu_custom_call.1} parent=1 // pred_check
      _
    $region43: #{tpu_custom_call.1} parent=1 // pred_check_branch
      %2087 = sbr.rel (0) target = $region45
    $region44: #{tpu_custom_call.1} parent=1 // pred_region
      %s2089 = ssub.s32 512, 512
      %2090 = vsyncadd [#allocation5], %s2089
      %s2091 = sshll.u32 [#allocation11], 4
      %s2092 = int_to_ptr.vmem [resolvable:$true] %s2091
      %2097 = dma.vmem_to_hbm [thread:$0]  %s2092, 512, %s6, [#allocation5], 128, 128, 8
    $region45: #{tpu_custom_call.1} parent=1 // pred_fallthru
      _
    // Predicated region
    $region46: #{tpu_custom_call.1} parent=1 // pred_check
      _
    $region47: #{tpu_custom_call.1} parent=1 // pred_check_branch
      %2099 = sbr.rel (0) target = $region49
    $region48: #{tpu_custom_call.1} parent=1 // pred_region
      %2100 = dma.done [#allocation5], 512
    $region49: #{tpu_custom_call.1} parent=1 // pred_fallthru
      _
    %2101 = vsyncpa [#allocation4], 1
    %2102 = vsyncpa [#allocation7], 1
    %2103 = vsyncpa [#allocation10], 1
    %2104 = vsyncpa [#allocation5], 1

</llo_original>
